<compile_context>
chip_gen: v7x
topology: tpu7x:2x2x1
jax: 0.10.0
libtpu: 0.0.40
codegen_flags: <defaults>
</compile_context>

<pallas_src>
import functools

import numpy as np
import jax
import jax.numpy as jnp
from jax.experimental import pallas as pl
from jax.experimental.pallas import tpu as pltpu

EPS = 1e-5


def _rup(x, m):
    return ((x + m - 1) // m) * m


def _vmem_capacity_bytes():
    """Physical VMEM per TensorCore (generation-aware tiling budget)."""
    try:
        info = pltpu.get_tpu_info()
        for name in ("vmem_capacity_bytes", "vmem_size_bytes", "vmem_bytes"):
            cap = getattr(info, name, None)
            if cap:
                return int(cap)
    except Exception:
        pass
    return 64 * 1024 * 1024  # conservative fallback, safe on every generation


def _pick_bt(batch):
    """Batch elements per grid step.

    Largest block that (a) keeps the output block's second-minor dim a multiple
    of 8 and (b) leaves >= 2 parallel grid steps so both v7x TensorCores get
    work; falls back to the whole batch otherwise.
    """
    for bt in (64, 32, 16, 8):
        if batch % bt == 0 and batch // bt >= 2:
            return bt
    # TODO(synk): for small / awkward B, pad the batch to 16 in the wrapper so the
    # second v7x TensorCore gets a grid step instead of idling.
    return batch


def make_plan(xs_shapes, cout, vmem_capacity=None):
    """Choose batch block, per-level spatial chunking and the VMEM limit.

    Per-step VMEM ~= sum_i 2(double buffer) * bt * HWc_i * Cin_i(lane padded) * 2B
                     + f32 conv/ReLU temporary of the largest level + slack.
    The spatial chunk count is doubled until that fits ~75% of physical VMEM.
    """
    if vmem_capacity is None:
        vmem_capacity = _vmem_capacity_bytes()
    budget = (vmem_capacity * 3) // 4

    B = xs_shapes[0][0]
    bt = _pick_bt(B)
    hw_list = [h * w for (_, _, h, w) in xs_shapes]
    cin_list = [c for (_, c, _, _) in xs_shapes]
    cout_pad = _rup(cout, 128)

    def level_tiles(n_chunks):
        tiles = []
        for hw in hw_list:
            nci = max(1, min(n_chunks, -(-hw // 16)))   # keep chunks >= one sublane tile
            hwc = _rup(-(-hw // nci), 16)               # bf16 sublane tile -> free reshapes
            tiles.append((nci, hwc))
        return tiles

    def vmem_bytes(tiles):
        inp = sum(2 * bt * hwc * _rup(cin, 128) * 2          # bf16, double-buffered
                  for (_, hwc), cin in zip(tiles, cin_list))
        tmp = max(bt * hwc * cout_pad * 4 for (_, hwc) in tiles)   # f32 conv/ReLU temp
        return inp + 2 * tmp + 4 * 1024 * 1024               # weights / out / scratch slack

    n_chunks = 1
    while vmem_bytes(level_tiles(n_chunks)) > budget and n_chunks < 1024:
        n_chunks *= 2
    tiles = level_tiles(n_chunks)

    return {
        "bt": bt,
        "n_chunks": max(nci for nci, _ in tiles),
        "level_chunks": [nci for nci, _ in tiles],
        "level_hwc": [hwc for _, hwc in tiles],
        "hw_list": hw_list,
        "hw_pad_list": [nci * hwc for nci, hwc in tiles],
        "cout": cout,
        "cout_pad": cout_pad,
        "vmem_limit": int(budget),
    }


def _ms_pfc_kernel(num_levels, bt, level_chunks, n_chunks, *refs):
    """Fused forward for one (bt batch, spatial-chunk) tile of every level.

    refs = (x_0..x_{L-1}, w_0..w_{L-1}, s_0..s_{L-1}, wfc, sfc, o, pool)
      x_i : (bt, HWc_i, Cin_i) bf16   channels-last activation chunk
      w_i : (Cin_i, Cout)      bf16   conv weight with BN2d scale folded in
      s_i : (1, Cout)          f32    conv bias + BN2d shift, folded
      wfc : (L, Cout, Cout_pad) f32   fc weight with BN1d scale and 1/HW_i folded in
      sfc : (1, Cout_pad)      f32    fc bias + BN1d shift (+ pad-pixel correction)
      o   : (bt, Cout_pad)     f32    lane-dense padded output block
      pool: (L, bt, Cout)      f32    VMEM scratch: per-level spatial sums
    """
    L = num_levels
    x_refs = refs[:L]
    w_refs = refs[L:2 * L]
    s_refs = refs[2 * L:3 * L]
    wfc_ref = refs[3 * L]
    sfc_ref = refs[3 * L + 1]
    o_ref = refs[3 * L + 2]
    pool_ref = refs[3 * L + 3]

    c_idx = pl.program_id(1)

    @pl.when(c_idx == 0)
    def _():
        pool_ref[...] = jnp.zeros_like(pool_ref)

    # Per level: 1x1 conv (+ folded BN2d) -> ReLU -> partial spatial sum.
    # All levels use the channels-last MXU path; with arithmetic intensity
    # ~Cout flop/byte the kernel is HBM-bound, so small-Cin levels only spend
    # otherwise-idle MXU cycles (no VALU / store-slot pressure, no f32 x copy).
    for i in range(L):
        x_ref, w_ref, s_ref = x_refs[i], w_refs[i], s_refs[i]

        def level_body(i=i, x_ref=x_ref, w_ref=w_ref, s_ref=s_ref):
            _, hwc, cin = x_ref.shape
            x2 = x_ref[...].reshape(bt * hwc, cin)            # free: hwc % 16 == 0
            y = jnp.dot(x2, w_ref[...], preferred_element_type=jnp.float32)
            y = jnp.maximum(y + s_ref[...], 0.0)              # conv + BN2d + ReLU
            pool_ref[i] = pool_ref[i] + jnp.sum(y.reshape(bt, hwc, -1), axis=1)

        if level_chunks[i] == n_chunks:
            level_body()
        else:
            # This level has fewer spatial chunks than the grid axis: its block
            # index is clamped in the index_map (no re-DMA) and its accumulation
            # is skipped on the extra steps.
            pl.when(c_idx < level_chunks[i])(level_body)

    # Last chunk: fc (+ folded BN1d) on the pooled features; Dropout(p=0) == Id.
    @pl.when(c_idx == n_chunks - 1)
    def _():
        cout_pad = o_ref.shape[-1]
        acc = jnp.broadcast_to(sfc_ref[...], (bt, cout_pad))
        for i in range(L):
            # 1/HW_i and the BN1d scale are folded into wfc[i], so summing the
            # per-level matmuls == concat(per-level pooled means) @ Wfc.
            acc = acc + jnp.dot(pool_ref[i], wfc_ref[i],
                                preferred_element_type=jnp.float32)
        o_ref[...] = acc


def multi_scale_pfc_forward(xs_nchw, folded, plan):
    """xs_nchw: list of (B, Cin_i, H_i, W_i) float32 arrays. Returns (B, Cout)."""
    L = len(xs_nchw)
    B = xs_nchw[0].shape[0]
    bt = plan["bt"]
    cout, cout_pad = plan["cout"], plan["cout_pad"]
    n_chunks = plan["n_chunks"]

    # Layout glue (pure XLA, outside the kernel): channels-last, spatial padded to
    # a multiple of 16 (pad-pixel contribution folded out of the fc bias), bf16 to
    # halve HBM->VMEM DMA traffic; all in-kernel accumulation stays f32.
    xs = []
    for x, hw_pad in zip(xs_nchw, plan["hw_pad_list"]):
        b, c, h, w = x.shape
        x_cl = jnp.transpose(x, (0, 2, 3, 1)).reshape(b, h * w, c)
        if hw_pad > h * w:
            x_cl = jnp.pad(x_cl, ((0, 0), (0, hw_pad - h * w), (0, 0)))
        xs.append(x_cl.astype(jnp.bfloat16))

    def x_index_map(nci):
        if nci == n_chunks:
            return lambda bb, cc: (bb, cc, 0)
        if nci == 1:
            return lambda bb, cc: (bb, 0, 0)
        return lambda bb, cc, nci=nci: (bb, jnp.minimum(cc, nci - 1), 0)

    in_specs = []
    for x, hwc, nci in zip(xs, plan["level_hwc"], plan["level_chunks"]):
        in_specs.append(pl.BlockSpec((bt, hwc, x.shape[-1]), x_index_map(nci)))
    for w in folded["w_levels"]:
        in_specs.append(pl.BlockSpec(w.shape, lambda bb, cc: (0, 0)))
    for s in folded["s_levels"]:
        in_specs.append(pl.BlockSpec(s.shape, lambda bb, cc: (0, 0)))
    in_specs.append(pl.BlockSpec(folded["wfc"].shape, lambda bb, cc: (0, 0, 0)))
    in_specs.append(pl.BlockSpec(folded["sfc"].shape, lambda bb, cc: (0, 0)))

    out = pl.pallas_call(
        functools.partial(_ms_pfc_kernel, L, bt,
                          tuple(plan["level_chunks"]), n_chunks),
        out_shape=jax.ShapeDtypeStruct((B, cout_pad), jnp.float32),
        grid=(B // bt, n_chunks),
        in_specs=in_specs,
        out_specs=pl.BlockSpec((bt, cout_pad), lambda bb, cc: (bb, 0)),
        scratch_shapes=[pltpu.VMEM((L, bt, cout), jnp.float32)],
        compiler_params=pltpu.CompilerParams(
            dimension_semantics=("parallel", "arbitrary"),
            vmem_limit_bytes=plan["vmem_limit"]),
    )(*xs, *folded["w_levels"], *folded["s_levels"], folded["wfc"], folded["sfc"])
    return out[:, :cout]


def init_raw_params(key, in_channels_list, out_channels):
    """Deterministic synthetic parameters matching the module's shapes."""
    L = len(in_channels_list)
    lvl_keys = jax.random.split(key, L + 1)
    raw = {"conv_w": [], "conv_b": [], "bn_gamma": [], "bn_beta": [],
           "bn_mean": [], "bn_var": []}
    for i, cin in enumerate(in_channels_list):
        ks = jax.random.split(lvl_keys[i], 6)
        raw["conv_w"].append(0.05 * jax.random.normal(ks[0], (out_channels, cin), jnp.float32))
        raw["conv_b"].append(0.05 * jax.random.normal(ks[1], (out_channels,), jnp.float32))
        raw["bn_gamma"].append(1.0 + 0.1 * jax.random.normal(ks[2], (out_channels,), jnp.float32))
        raw["bn_beta"].append(0.1 * jax.random.normal(ks[3], (out_channels,), jnp.float32))
        raw["bn_mean"].append(0.1 * jax.random.normal(ks[4], (out_channels,), jnp.float32))
        raw["bn_var"].append(1.0 + 0.1 * jnp.abs(jax.random.normal(ks[5], (out_channels,), jnp.float32)))
    ks = jax.random.split(lvl_keys[-1], 5)
    raw["fc_w"] = 0.01 * jax.random.normal(ks[0], (out_channels, out_channels * L), jnp.float32)
    raw["fc_b"] = jnp.zeros((out_channels,), jnp.float32)   # init_weights bias=0
    raw["bnf_gamma"] = 1.0 + 0.1 * jax.random.normal(ks[1], (out_channels,), jnp.float32)
    raw["bnf_beta"] = 0.1 * jax.random.normal(ks[2], (out_channels,), jnp.float32)
    raw["bnf_mean"] = 0.1 * jax.random.normal(ks[3], (out_channels,), jnp.float32)
    raw["bnf_var"] = 1.0 + 0.1 * jnp.abs(jax.random.normal(ks[4], (out_channels,), jnp.float32))
    return raw


def fold_params(raw, hw_list, hw_pad_list):
    """Fold eval-mode BN, the 1/HW pooling scale, spatial padding and lane padding."""
    L = len(raw["conv_w"])
    cout = raw["fc_w"].shape[0]
    cout_pad = _rup(cout, 128)
    w_levels, s_levels, shifts = [], [], []
    for i in range(L):
        a = raw["bn_gamma"][i] / jnp.sqrt(raw["bn_var"][i] + EPS)
        c = raw["bn_beta"][i] - a * raw["bn_mean"][i]
        w_eff = raw["conv_w"][i].T * a[None, :]             # (Cin, Cout)
        s_eff = a * raw["conv_b"][i] + c                    # (Cout,)
        w_levels.append(w_eff.astype(jnp.bfloat16))         # MXU path, bf16 weight
        s_levels.append(s_eff.reshape(1, cout).astype(jnp.float32))
        shifts.append(s_eff)

    af = raw["bnf_gamma"] / jnp.sqrt(raw["bnf_var"] + EPS)
    cf = raw["bnf_beta"] - af * raw["bnf_mean"]
    wfc_eff = (raw["fc_w"].T * af[None, :]).reshape(L, cout, cout)
    # Fold adaptive_avg_pool's 1/HW_i so the kernel only needs a spatial sum.
    wfc_eff = wfc_eff / jnp.asarray(hw_list, jnp.float32).reshape(L, 1, 1)
    sfc = af * raw["fc_b"] + cf
    # Zero-padded spatial pixels each contribute relu(shift) to a level's spatial
    # sum; that contribution is constant, so subtract it from the folded fc bias.
    for i in range(L):
        n_pad = int(hw_pad_list[i]) - int(hw_list[i])
        if n_pad > 0:
            sfc = sfc - n_pad * (jnp.maximum(shifts[i], 0.0) @ wfc_eff[i])

    wfc_pad = jnp.zeros((L, cout, cout_pad), jnp.float32).at[:, :, :cout].set(wfc_eff)
    sfc_pad = jnp.zeros((1, cout_pad), jnp.float32).at[0, :cout].set(sfc)
    return {"w_levels": w_levels, "s_levels": s_levels, "wfc": wfc_pad, "sfc": sfc_pad}


def reference_forward(xs_nchw, raw):
    """Pure-JAX reference mirroring the PyTorch module (eval-mode BN, p=0 dropout)."""
    outs = []
    for i, x in enumerate(xs_nchw):
        b, c, h, w = x.shape
        xf = jnp.transpose(x, (0, 2, 3, 1)).reshape(b, h * w, c)
        y = jnp.einsum("bpc,oc->bpo", xf, raw["conv_w"][i]) + raw["conv_b"][i]
        y = (y - raw["bn_mean"][i]) / jnp.sqrt(raw["bn_var"][i] + EPS) \
            * raw["bn_gamma"][i] + raw["bn_beta"][i]
        y = jnp.maximum(y, 0.0)
        outs.append(jnp.mean(y, axis=1))
    feat = jnp.concatenate(outs, axis=1)
    z = feat @ raw["fc_w"].T + raw["fc_b"]
    z = (z - raw["bnf_mean"]) / jnp.sqrt(raw["bnf_var"] + EPS) \
        * raw["bnf_gamma"] + raw["bnf_beta"]
    return z


if __name__ == "__main__":
    key = jax.random.PRNGKey(0)
    # Two small-Cin pyramid levels + one wide level (all via the MXU path).
    in_channels_list = [4, 8, 128]
    spatials = [16, 8, 4]
    out_channels = 32
    B = 2

    k_in, k_par = jax.random.split(key)
    in_keys = jax.random.split(k_in, len(in_channels_list))
    xs_nchw = [
        jax.random.normal(in_keys[i], (B, cin, s, s), jnp.float32)
        for i, (cin, s) in enumerate(zip(in_channels_list, spatials))
    ]

    raw = init_raw_params(k_par, in_channels_list, out_channels)
    plan = make_plan([x.shape for x in xs_nchw], out_channels)
    folded = fold_params(raw, plan["hw_list"], plan["hw_pad_list"])

    out = jax.block_until_ready(multi_scale_pfc_forward(xs_nchw, folded, plan))
    ref = jax.block_until_ready(reference_forward(xs_nchw, raw))

    np.testing.assert_allclose(np.asarray(out), np.asarray(ref), rtol=2e-3, atol=2e-3)
    assert out.shape == (B, out_channels)
    print("KERNEL_OK")
</pallas_src>

<mosaic_0001>
module attributes {stable_mosaic.version = 11 : i64} {
  func.func @_ms_pfc_kernel(%arg0: i32, %arg1: i32, %arg2: memref<2x256x4xbf16, #tpu.memory_space<vmem>>, %arg3: memref<2x64x8xbf16, #tpu.memory_space<vmem>>, %arg4: memref<2x16x128xbf16, #tpu.memory_space<vmem>>, %arg5: memref<4x32xbf16, #tpu.memory_space<vmem>>, %arg6: memref<8x32xbf16, #tpu.memory_space<vmem>>, %arg7: memref<128x32xbf16, #tpu.memory_space<vmem>>, %arg8: memref<1x32xf32, #tpu.memory_space<vmem>>, %arg9: memref<1x32xf32, #tpu.memory_space<vmem>>, %arg10: memref<1x32xf32, #tpu.memory_space<vmem>>, %arg11: memref<3x32x128xf32, #tpu.memory_space<vmem>>, %arg12: memref<1x128xf32, #tpu.memory_space<vmem>>, %arg13: memref<2x128xf32, #tpu.memory_space<vmem>>, %arg14: memref<3x2x32xf32, #tpu.memory_space<vmem>>) attributes {dimension_semantics = [#tpu.dimension_semantics<parallel>, #tpu.dimension_semantics<arbitrary>], iteration_bounds = array<i64: 1, 1>, scalar_prefetch = 0 : i64, scratch_operands = 1 : i64, tpu.core_type = #tpu.core_type<tc>, window_params = [{transform_indices = @transform_0, window_bounds = array<i64: 2, 256, 4>}, {transform_indices = @transform_1, window_bounds = array<i64: 2, 64, 8>}, {transform_indices = @transform_2, window_bounds = array<i64: 2, 16, 128>}, {pipeline_mode = #tpu.pipeline_mode<synchronous>, transform_indices = @transform_3, window_bounds = array<i64: 4, 32>}, {pipeline_mode = #tpu.pipeline_mode<synchronous>, transform_indices = @transform_4, window_bounds = array<i64: 8, 32>}, {pipeline_mode = #tpu.pipeline_mode<synchronous>, transform_indices = @transform_5, window_bounds = array<i64: 128, 32>}, {pipeline_mode = #tpu.pipeline_mode<synchronous>, transform_indices = @transform_6, window_bounds = array<i64: 1, 32>}, {pipeline_mode = #tpu.pipeline_mode<synchronous>, transform_indices = @transform_7, window_bounds = array<i64: 1, 32>}, {pipeline_mode = #tpu.pipeline_mode<synchronous>, transform_indices = @transform_8, window_bounds = array<i64: 1, 32>}, {pipeline_mode = #tpu.pipeline_mode<synchronous>, transform_indices = @transform_9, window_bounds = array<i64: 3, 32, 128>}, {pipeline_mode = #tpu.pipeline_mode<synchronous>, transform_indices = @transform_10, window_bounds = array<i64: 1, 128>}, {transform_indices = @transform_11, window_bounds = array<i64: 2, 128>}]} {
    %c0_i32 = arith.constant 0 : i32
    %0 = arith.cmpi eq, %arg1, %c0_i32 : i32
    %1 = arith.extui %0 : i1 to i32
    %c0_i32_0 = arith.constant 0 : i32
    %2 = arith.cmpi ne, %1, %c0_i32_0 : i32
    scf.if %2 {
      %cst_47 = arith.constant 0.000000e+00 : f32
      %57 = vector.broadcast %cst_47 : f32 to vector<3x2x32xf32>
      %c0_48 = arith.constant 0 : index
      %c0_49 = arith.constant 0 : index
      %c0_50 = arith.constant 0 : index
      %58 = vector.load %arg14[%c0_48, %c0_49, %c0_50] : memref<3x2x32xf32, #tpu.memory_space<vmem>>, vector<3x2x32xf32>
      tpu.vector_store %arg14[%c0_48, %c0_49, %c0_50], %57 {strides = array<i32>} : memref<3x2x32xf32, #tpu.memory_space<vmem>>, vector<3x2x32xf32>,
    } else {
    }
    %c0 = arith.constant 0 : index
    %c0_1 = arith.constant 0 : index
    %c0_2 = arith.constant 0 : index
    %3 = vector.load %arg2[%c0, %c0_1, %c0_2] : memref<2x256x4xbf16, #tpu.memory_space<vmem>>, vector<2x256x4xbf16>
    %4 = vector.shape_cast %3 : vector<2x256x4xbf16> to vector<512x4xbf16>
    %c0_3 = arith.constant 0 : index
    %c0_4 = arith.constant 0 : index
    %5 = vector.load %arg5[%c0_3, %c0_4] : memref<4x32xbf16, #tpu.memory_space<vmem>>, vector<4x32xbf16>
    %cst = arith.constant dense<0.000000e+00> : vector<512x32xf32>
    %6 = tpu.matmul %4, %5, %cst {dimension_numbers = #tpu.dot_dimension_numbers<[1], [0], [0], [1], [0, 0, 1, 1], [], []>} : vector<512x4xbf16>, vector<4x32xbf16>, vector<512x32xf32> -> vector<512x32xf32>
    %c0_5 = arith.constant 0 : index
    %c0_6 = arith.constant 0 : index
    %7 = vector.load %arg8[%c0_5, %c0_6] : memref<1x32xf32, #tpu.memory_space<vmem>>, vector<1x32xf32>
    %8 = vector.broadcast %7 : vector<1x32xf32> to vector<512x32xf32>
    %9 = arith.addf %6, %8 : vector<512x32xf32>
    %cst_7 = arith.constant 0.000000e+00 : f32
    %10 = vector.broadcast %cst_7 : f32 to vector<512x32xf32>
    %11 = arith.maximumf %9, %10 : vector<512x32xf32>
    %c0_8 = arith.constant 0 : index
    %c0_9 = arith.constant 0 : index
    %c0_10 = arith.constant 0 : index
    %12 = vector.load %arg14[%c0_8, %c0_9, %c0_10] : memref<3x2x32xf32, #tpu.memory_space<vmem>>, vector<1x2x32xf32>
    %13 = vector.shape_cast %12 : vector<1x2x32xf32> to vector<2x32xf32>
    %14 = vector.shape_cast %11 : vector<512x32xf32> to vector<2x256x32xf32>
    %cst_11 = arith.constant dense<0.000000e+00> : vector<2x32xf32>
    %15 = vector.multi_reduction <add>, %14, %cst_11 [1] : vector<2x256x32xf32> to vector<2x32xf32>
    %16 = arith.addf %13, %15 : vector<2x32xf32>
    %c0_12 = arith.constant 0 : index
    %c0_13 = arith.constant 0 : index
    %c0_14 = arith.constant 0 : index
    %17 = vector.load %arg14[%c0_12, %c0_13, %c0_14] : memref<3x2x32xf32, #tpu.memory_space<vmem>>, vector<1x2x32xf32>
    %18 = vector.shape_cast %17 : vector<1x2x32xf32> to vector<2x32xf32>
    %19 = vector.shape_cast %16 : vector<2x32xf32> to vector<1x2x32xf32>
    tpu.vector_store %arg14[%c0_12, %c0_13, %c0_14], %19 {strides = array<i32>} : memref<3x2x32xf32, #tpu.memory_space<vmem>>, vector<1x2x32xf32>,
    %c0_15 = arith.constant 0 : index
    %c0_16 = arith.constant 0 : index
    %c0_17 = arith.constant 0 : index
    %20 = vector.load %arg3[%c0_15, %c0_16, %c0_17] : memref<2x64x8xbf16, #tpu.memory_space<vmem>>, vector<2x64x8xbf16>
    %21 = vector.shape_cast %20 : vector<2x64x8xbf16> to vector<128x8xbf16>
    %c0_18 = arith.constant 0 : index
    %c0_19 = arith.constant 0 : index
    %22 = vector.load %arg6[%c0_18, %c0_19] : memref<8x32xbf16, #tpu.memory_space<vmem>>, vector<8x32xbf16>
    %cst_20 = arith.constant dense<0.000000e+00> : vector<128x32xf32>
    %23 = tpu.matmul %21, %22, %cst_20 {dimension_numbers = #tpu.dot_dimension_numbers<[1], [0], [0], [1], [0, 0, 1, 1], [], []>} : vector<128x8xbf16>, vector<8x32xbf16>, vector<128x32xf32> -> vector<128x32xf32>
    %c0_21 = arith.constant 0 : index
    %c0_22 = arith.constant 0 : index
    %24 = vector.load %arg9[%c0_21, %c0_22] : memref<1x32xf32, #tpu.memory_space<vmem>>, vector<1x32xf32>
    %25 = vector.broadcast %24 : vector<1x32xf32> to vector<128x32xf32>
    %26 = arith.addf %23, %25 : vector<128x32xf32>
    %cst_23 = arith.constant 0.000000e+00 : f32
    %27 = vector.broadcast %cst_23 : f32 to vector<128x32xf32>
    %28 = arith.maximumf %26, %27 : vector<128x32xf32>
    %c1 = arith.constant 1 : index
    %c0_24 = arith.constant 0 : index
    %c0_25 = arith.constant 0 : index
    %29 = vector.load %arg14[%c1, %c0_24, %c0_25] : memref<3x2x32xf32, #tpu.memory_space<vmem>>, vector<1x2x32xf32>
    %30 = vector.shape_cast %29 : vector<1x2x32xf32> to vector<2x32xf32>
    %31 = vector.shape_cast %28 : vector<128x32xf32> to vector<2x64x32xf32>
    %cst_26 = arith.constant dense<0.000000e+00> : vector<2x32xf32>
    %32 = vector.multi_reduction <add>, %31, %cst_26 [1] : vector<2x64x32xf32> to vector<2x32xf32>
    %33 = arith.addf %30, %32 : vector<2x32xf32>
    %c1_27 = arith.constant 1 : index
    %c0_28 = arith.constant 0 : index
    %c0_29 = arith.constant 0 : index
    %34 = vector.load %arg14[%c1_27, %c0_28, %c0_29] : memref<3x2x32xf32, #tpu.memory_space<vmem>>, vector<1x2x32xf32>
    %35 = vector.shape_cast %34 : vector<1x2x32xf32> to vector<2x32xf32>
    %36 = vector.shape_cast %33 : vector<2x32xf32> to vector<1x2x32xf32>
    tpu.vector_store %arg14[%c1_27, %c0_28, %c0_29], %36 {strides = array<i32>} : memref<3x2x32xf32, #tpu.memory_space<vmem>>, vector<1x2x32xf32>,
    %c0_30 = arith.constant 0 : index
    %c0_31 = arith.constant 0 : index
    %c0_32 = arith.constant 0 : index
    %37 = vector.load %arg4[%c0_30, %c0_31, %c0_32] : memref<2x16x128xbf16, #tpu.memory_space<vmem>>, vector<2x16x128xbf16>
    %38 = vector.shape_cast %37 : vector<2x16x128xbf16> to vector<32x128xbf16>
    %c0_33 = arith.constant 0 : index
    %c0_34 = arith.constant 0 : index
    %39 = vector.load %arg7[%c0_33, %c0_34] : memref<128x32xbf16, #tpu.memory_space<vmem>>, vector<128x32xbf16>
    %cst_35 = arith.constant dense<0.000000e+00> : vector<32x32xf32>
    %40 = tpu.matmul %38, %39, %cst_35 {dimension_numbers = #tpu.dot_dimension_numbers<[1], [0], [0], [1], [0, 0, 1, 1], [], []>} : vector<32x128xbf16>, vector<128x32xbf16>, vector<32x32xf32> -> vector<32x32xf32>
    %c0_36 = arith.constant 0 : index
    %c0_37 = arith.constant 0 : index
    %41 = vector.load %arg10[%c0_36, %c0_37] : memref<1x32xf32, #tpu.memory_space<vmem>>, vector<1x32xf32>
    %42 = vector.broadcast %41 : vector<1x32xf32> to vector<32x32xf32>
    %43 = arith.addf %40, %42 : vector<32x32xf32>
    %cst_38 = arith.constant 0.000000e+00 : f32
    %44 = vector.broadcast %cst_38 : f32 to vector<32x32xf32>
    %45 = arith.maximumf %43, %44 : vector<32x32xf32>
    %c2 = arith.constant 2 : index
    %c0_39 = arith.constant 0 : index
    %c0_40 = arith.constant 0 : index
    %46 = vector.load %arg14[%c2, %c0_39, %c0_40] : memref<3x2x32xf32, #tpu.memory_space<vmem>>, vector<1x2x32xf32>
    %47 = vector.shape_cast %46 : vector<1x2x32xf32> to vector<2x32xf32>
    %48 = vector.shape_cast %45 : vector<32x32xf32> to vector<2x16x32xf32>
    %cst_41 = arith.constant dense<0.000000e+00> : vector<2x32xf32>
    %49 = vector.multi_reduction <add>, %48, %cst_41 [1] : vector<2x16x32xf32> to vector<2x32xf32>
    %50 = arith.addf %47, %49 : vector<2x32xf32>
    %c2_42 = arith.constant 2 : index
    %c0_43 = arith.constant 0 : index
    %c0_44 = arith.constant 0 : index
    %51 = vector.load %arg14[%c2_42, %c0_43, %c0_44] : memref<3x2x32xf32, #tpu.memory_space<vmem>>, vector<1x2x32xf32>
    %52 = vector.shape_cast %51 : vector<1x2x32xf32> to vector<2x32xf32>
    %53 = vector.shape_cast %50 : vector<2x32xf32> to vector<1x2x32xf32>
    tpu.vector_store %arg14[%c2_42, %c0_43, %c0_44], %53 {strides = array<i32>} : memref<3x2x32xf32, #tpu.memory_space<vmem>>, vector<1x2x32xf32>,
    %c0_i32_45 = arith.constant 0 : i32
    %54 = arith.cmpi eq, %arg1, %c0_i32_45 : i32
    %55 = arith.extui %54 : i1 to i32
    %c0_i32_46 = arith.constant 0 : i32
    %56 = arith.cmpi ne, %55, %c0_i32_46 : i32
    scf.if %56 {
      %c0_47 = arith.constant 0 : index
      %c0_48 = arith.constant 0 : index
      %57 = vector.load %arg12[%c0_47, %c0_48] : memref<1x128xf32, #tpu.memory_space<vmem>>, vector<1x128xf32>
      %58 = vector.shape_cast %57 : vector<1x128xf32> to vector<1x128xf32>
      %59 = vector.broadcast %58 : vector<1x128xf32> to vector<2x128xf32>
      %c0_49 = arith.constant 0 : index
      %c0_50 = arith.constant 0 : index
      %c0_51 = arith.constant 0 : index
      %60 = vector.load %arg14[%c0_49, %c0_50, %c0_51] : memref<3x2x32xf32, #tpu.memory_space<vmem>>, vector<1x2x32xf32>
      %61 = vector.shape_cast %60 : vector<1x2x32xf32> to vector<2x32xf32>
      %c0_52 = arith.constant 0 : index
      %c0_53 = arith.constant 0 : index
      %c0_54 = arith.constant 0 : index
      %62 = vector.load %arg11[%c0_52, %c0_53, %c0_54] : memref<3x32x128xf32, #tpu.memory_space<vmem>>, vector<1x32x128xf32>
      %63 = vector.shape_cast %62 : vector<1x32x128xf32> to vector<32x128xf32>
      %cst_55 = arith.constant dense<0.000000e+00> : vector<2x128xf32>
      %64 = tpu.matmul %61, %63, %cst_55 {dimension_numbers = #tpu.dot_dimension_numbers<[1], [0], [0], [1], [0, 0, 1, 1], [], []>} : vector<2x32xf32>, vector<32x128xf32>, vector<2x128xf32> -> vector<2x128xf32>
      %65 = arith.addf %59, %64 : vector<2x128xf32>
      %c1_56 = arith.constant 1 : index
      %c0_57 = arith.constant 0 : index
      %c0_58 = arith.constant 0 : index
      %66 = vector.load %arg14[%c1_56, %c0_57, %c0_58] : memref<3x2x32xf32, #tpu.memory_space<vmem>>, vector<1x2x32xf32>
      %67 = vector.shape_cast %66 : vector<1x2x32xf32> to vector<2x32xf32>
      %c1_59 = arith.constant 1 : index
      %c0_60 = arith.constant 0 : index
      %c0_61 = arith.constant 0 : index
      %68 = vector.load %arg11[%c1_59, %c0_60, %c0_61] : memref<3x32x128xf32, #tpu.memory_space<vmem>>, vector<1x32x128xf32>
      %69 = vector.shape_cast %68 : vector<1x32x128xf32> to vector<32x128xf32>
      %cst_62 = arith.constant dense<0.000000e+00> : vector<2x128xf32>
      %70 = tpu.matmul %67, %69, %cst_62 {dimension_numbers = #tpu.dot_dimension_numbers<[1], [0], [0], [1], [0, 0, 1, 1], [], []>} : vector<2x32xf32>, vector<32x128xf32>, vector<2x128xf32> -> vector<2x128xf32>
      %71 = arith.addf %65, %70 : vector<2x128xf32>
      %c2_63 = arith.constant 2 : index
      %c0_64 = arith.constant 0 : index
      %c0_65 = arith.constant 0 : index
      %72 = vector.load %arg14[%c2_63, %c0_64, %c0_65] : memref<3x2x32xf32, #tpu.memory_space<vmem>>, vector<1x2x32xf32>
      %73 = vector.shape_cast %72 : vector<1x2x32xf32> to vector<2x32xf32>
      %c2_66 = arith.constant 2 : index
      %c0_67 = arith.constant 0 : index
      %c0_68 = arith.constant 0 : index
      %74 = vector.load %arg11[%c2_66, %c0_67, %c0_68] : memref<3x32x128xf32, #tpu.memory_space<vmem>>, vector<1x32x128xf32>
      %75 = vector.shape_cast %74 : vector<1x32x128xf32> to vector<32x128xf32>
      %cst_69 = arith.constant dense<0.000000e+00> : vector<2x128xf32>
      %76 = tpu.matmul %73, %75, %cst_69 {dimension_numbers = #tpu.dot_dimension_numbers<[1], [0], [0], [1], [0, 0, 1, 1], [], []>} : vector<2x32xf32>, vector<32x128xf32>, vector<2x128xf32> -> vector<2x128xf32>
      %77 = arith.addf %71, %76 : vector<2x128xf32>
      %c0_70 = arith.constant 0 : index
      %c0_71 = arith.constant 0 : index
      %78 = vector.load %arg13[%c0_70, %c0_71] : memref<2x128xf32, #tpu.memory_space<vmem>>, vector<2x128xf32>
      tpu.vector_store %arg13[%c0_70, %c0_71], %77 {strides = array<i32>} : memref<2x128xf32, #tpu.memory_space<vmem>>, vector<2x128xf32>,
    } else {
    }
    return
  }
  func.func @transform_0(%arg0: i32, %arg1: i32) -> (i32, i32, i32) {
    %c0_i32 = arith.constant 0 : i32
    %c0_i32_0 = arith.constant 0 : i32
    return %arg0, %arg1, %c0_i32 : i32, i32, i32
  }
  func.func @transform_1(%arg0: i32, %arg1: i32) -> (i32, i32, i32) {
    %c0_i32 = arith.constant 0 : i32
    %c0_i32_0 = arith.constant 0 : i32
    return %arg0, %arg1, %c0_i32 : i32, i32, i32
  }
  func.func @transform_2(%arg0: i32, %arg1: i32) -> (i32, i32, i32) {
    %c0_i32 = arith.constant 0 : i32
    %c0_i32_0 = arith.constant 0 : i32
    return %arg0, %arg1, %c0_i32 : i32, i32, i32
  }
  func.func @transform_3(%arg0: i32, %arg1: i32) -> (i32, i32) {
    %c0_i32 = arith.constant 0 : i32
    %c0_i32_0 = arith.constant 0 : i32
    %c0_i32_1 = arith.constant 0 : i32
    return %c0_i32, %c0_i32_0 : i32, i32
  }
  func.func @transform_4(%arg0: i32, %arg1: i32) -> (i32, i32) {
    %c0_i32 = arith.constant 0 : i32
    %c0_i32_0 = arith.constant 0 : i32
    %c0_i32_1 = arith.constant 0 : i32
    return %c0_i32, %c0_i32_0 : i32, i32
  }
  func.func @transform_5(%arg0: i32, %arg1: i32) -> (i32, i32) {
    %c0_i32 = arith.constant 0 : i32
    %c0_i32_0 = arith.constant 0 : i32
    %c0_i32_1 = arith.constant 0 : i32
    return %c0_i32, %c0_i32_0 : i32, i32
  }
  func.func @transform_6(%arg0: i32, %arg1: i32) -> (i32, i32) {
    %c0_i32 = arith.constant 0 : i32
    %c0_i32_0 = arith.constant 0 : i32
    %c0_i32_1 = arith.constant 0 : i32
    return %c0_i32, %c0_i32_0 : i32, i32
  }
  func.func @transform_7(%arg0: i32, %arg1: i32) -> (i32, i32) {
    %c0_i32 = arith.constant 0 : i32
    %c0_i32_0 = arith.constant 0 : i32
    %c0_i32_1 = arith.constant 0 : i32
    return %c0_i32, %c0_i32_0 : i32, i32
  }
  func.func @transform_8(%arg0: i32, %arg1: i32) -> (i32, i32) {
    %c0_i32 = arith.constant 0 : i32
    %c0_i32_0 = arith.constant 0 : i32
    %c0_i32_1 = arith.constant 0 : i32
    return %c0_i32, %c0_i32_0 : i32, i32
  }
  func.func @transform_9(%arg0: i32, %arg1: i32) -> (i32, i32, i32) {
    %c0_i32 = arith.constant 0 : i32
    %c0_i32_0 = arith.constant 0 : i32
    %c0_i32_1 = arith.constant 0 : i32
    %c0_i32_2 = arith.constant 0 : i32
    return %c0_i32, %c0_i32_0, %c0_i32_1 : i32, i32, i32
  }
  func.func @transform_10(%arg0: i32, %arg1: i32) -> (i32, i32) {
    %c0_i32 = arith.constant 0 : i32
    %c0_i32_0 = arith.constant 0 : i32
    %c0_i32_1 = arith.constant 0 : i32
    return %c0_i32, %c0_i32_0 : i32, i32
  }
  func.func @transform_11(%arg0: i32, %arg1: i32) -> (i32, i32) {
    %c0_i32 = arith.constant 0 : i32
    %c0_i32_0 = arith.constant 0 : i32
    return %arg0, %c0_i32 : i32, i32
  }
}

</mosaic_0001>

<llo_original>
// kernel: tpu_custom_call.1
$region0: #{tpu_custom_call.1}
  #allocation0 [shape = 'u32[]', space=smem, size = 0x4, offset = 0x4, fixed_abs, tag = 'smem constant byte address 0x4 - core index']
  #allocation1 [shape = 'u32[144,128]{1,0:T(1,128)}', space=vmem, size = 0x12000, scoped, tag = 'internal scratch']
  #allocation2 [shape = 'f32[3,2,32]{2,1,0:T(2,128)}', space=vmem, size = 0xc00, scoped, tag = 'scratch operand']
  %s0 = inlined_call_operand.vmem [shape: bf16[2,256,4], index: 0, kind: input, shape index: {}]
  %s1 = inlined_call_operand.vmem [shape: bf16[2,64,8], index: 1, kind: input, shape index: {}]
  %s2 = inlined_call_operand.vmem [shape: bf16[2,16,128], index: 2, kind: input, shape index: {}]
  %s3 = inlined_call_operand.vmem [shape: bf16[4,32], index: 3, kind: input, shape index: {}]
  %s4 = inlined_call_operand.vmem [shape: bf16[8,32], index: 4, kind: input, shape index: {}]
  %s5 = inlined_call_operand.vmem [shape: bf16[128,32], index: 5, kind: input, shape index: {}]
  %s6 = inlined_call_operand.vmem [shape: f32[1,32], index: 6, kind: input, shape index: {}]
  %s7 = inlined_call_operand.vmem [shape: f32[1,32], index: 7, kind: input, shape index: {}]
  %s8 = inlined_call_operand.vmem [shape: f32[1,32], index: 8, kind: input, shape index: {}]
  %s9 = inlined_call_operand.vmem [shape: f32[3,32,128], index: 9, kind: input, shape index: {}]
  %s10 = inlined_call_operand.vmem [shape: f32[1,128], index: 10, kind: input, shape index: {}]
  %s11 = inlined_call_operand.hbm [shape: f32[2,128], index: 11, kind: output, shape index: {}]
  %s12 = sld [smem:[#allocation0]]
  $region62: #{tpu_custom_call.1} parent=0
    _
  %s14 = ssub.s32 1, %s12
  %s15 = scalar_select 0, %s14, %s12
  $region1: #{tpu_custom_call.1} parent=0
    #allocation3 [shape = 'u8[1024]{0}', space=vmem, size = 0x400, scoped, tag = 'output window, operand 0, single buffered']
    #allocation4 [shape = 's32[1]{0}', space=sflag, size = 0x4, scoped, tag = 'scoped memory for tpu_custom_call.1']
    %16 = vsyncpa [#allocation4], 0
    // Predicated region
    $region2: #{tpu_custom_call.1} parent=1 // pred_check
      _
    $region3: #{tpu_custom_call.1} parent=1 // pred_check_branch
      %18 = sbr.rel (0) target = $region5
    $region4: #{tpu_custom_call.1} parent=1 // pred_region
      _
    $region5: #{tpu_custom_call.1} parent=1 // pred_fallthru
      _
    // Predicated region
    $region6: #{tpu_custom_call.1} parent=1 // pred_check
      _
    $region7: #{tpu_custom_call.1} parent=1 // pred_check_branch
      %20 = sbr.rel (0) target = $region9
    $region8: #{tpu_custom_call.1} parent=1 // pred_region
      _
    $region9: #{tpu_custom_call.1} parent=1 // pred_fallthru
      _
    // Predicated region
    $region10: #{tpu_custom_call.1} parent=1 // pred_check
      _
    $region11: #{tpu_custom_call.1} parent=1 // pred_check_branch
      %22 = sbr.rel (0) target = $region13
    $region12: #{tpu_custom_call.1} parent=1 // pred_region
      _
    $region13: #{tpu_custom_call.1} parent=1 // pred_fallthru
      _
    // Predicated region
    $region14: #{tpu_custom_call.1} parent=1 // pred_check
      _
    $region15: #{tpu_custom_call.1} parent=1 // pred_check_branch
      %24 = sbr.rel (0) target = $region17
    $region16: #{tpu_custom_call.1} parent=1 // pred_region
      _
    $region17: #{tpu_custom_call.1} parent=1 // pred_fallthru
      _
    // Predicated region
    $region18: #{tpu_custom_call.1} parent=1 // pred_check
      _
    $region19: #{tpu_custom_call.1} parent=1 // pred_check_branch
      %26 = sbr.rel (0) target = $region21
    $region20: #{tpu_custom_call.1} parent=1 // pred_region
      _
    $region21: #{tpu_custom_call.1} parent=1 // pred_fallthru
      _
    // Predicated region
    $region22: #{tpu_custom_call.1} parent=1 // pred_check
      _
    $region23: #{tpu_custom_call.1} parent=1 // pred_check_branch
      %28 = sbr.rel (0) target = $region25
    $region24: #{tpu_custom_call.1} parent=1 // pred_region
      _
    $region25: #{tpu_custom_call.1} parent=1 // pred_fallthru
      _
    // Predicated region
    $region26: #{tpu_custom_call.1} parent=1 // pred_check
      _
    $region27: #{tpu_custom_call.1} parent=1 // pred_check_branch
      %30 = sbr.rel (0) target = $region29
    $region28: #{tpu_custom_call.1} parent=1 // pred_region
      _
    $region29: #{tpu_custom_call.1} parent=1 // pred_fallthru
      _
    // Predicated region
    $region30: #{tpu_custom_call.1} parent=1 // pred_check
      _
    $region31: #{tpu_custom_call.1} parent=1 // pred_check_branch
      %32 = sbr.rel (0) target = $region33
    $region32: #{tpu_custom_call.1} parent=1 // pred_region
      _
    $region33: #{tpu_custom_call.1} parent=1 // pred_fallthru
      _
    // Predicated region
    $region34: #{tpu_custom_call.1} parent=1 // pred_check
      _
    $region35: #{tpu_custom_call.1} parent=1 // pred_check_branch
      %34 = sbr.rel (0) target = $region37
    $region36: #{tpu_custom_call.1} parent=1 // pred_region
      _
    $region37: #{tpu_custom_call.1} parent=1 // pred_fallthru
      _
    // Predicated region
    $region38: #{tpu_custom_call.1} parent=1 // pred_check
      _
    $region39: #{tpu_custom_call.1} parent=1 // pred_check_branch
      %36 = sbr.rel (0) target = $region41
    $region40: #{tpu_custom_call.1} parent=1 // pred_region
      _
    $region41: #{tpu_custom_call.1} parent=1 // pred_fallthru
      _
    // Predicated region
    $region42: #{tpu_custom_call.1} parent=1 // pred_check
      _
    $region43: #{tpu_custom_call.1} parent=1 // pred_check_branch
      %38 = sbr.rel (0) target = $region45
    $region44: #{tpu_custom_call.1} parent=1 // pred_region
      _
    $region45: #{tpu_custom_call.1} parent=1 // pred_fallthru
      _
    %p40 = scmp.eq.s32.totalorder 0, 0
    // Predicated region
    $region46: #{tpu_custom_call.1} parent=1 // pred_check
      %p41 = pneg %p40
    $region47: #{tpu_custom_call.1} parent=1 // pred_check_branch
      %43 = sbr.rel (%p41) target = $region49
    $region48: #{tpu_custom_call.1} parent=1 // pred_region
      %vm44 = vcmask 254976
      %45 = vst.msk [vmem:[#allocation2] sm:$0x3] %vm44, 0.0
      %46 = vst.msk [vmem:[#allocation2 + $0x2] sm:$0x3] %vm44, 0.0
      %47 = vst.msk [vmem:[#allocation2 + $0x4] sm:$0x3] %vm44, 0.0
    $region49: #{tpu_custom_call.1} parent=1 // pred_fallthru
      _
    %v48 = vld [vmem:[%s0] sm:$0xf]
    %v49 = vld [vmem:[%s0 + $0x4] sm:$0xf]
    %v50 = vld [vmem:[%s0 + $0x8] sm:$0xf]
    %v51 = vld [vmem:[%s0 + $0xc] sm:$0xf]
    %v52 = vld [vmem:[%s0 + $0x10] sm:$0xf]
    %v53 = vld [vmem:[%s0 + $0x14] sm:$0xf]
    %v54 = vld [vmem:[%s0 + $0x18] sm:$0xf]
    %v55 = vld [vmem:[%s0 + $0x1c] sm:$0xf]
    %v56 = vld [vmem:[%s0 + $0x20] sm:$0xf]
    %v57 = vld [vmem:[%s0 + $0x24] sm:$0xf]
    %v58 = vld [vmem:[%s0 + $0x28] sm:$0xf]
    %v59 = vld [vmem:[%s0 + $0x2c] sm:$0xf]
    %v60 = vld [vmem:[%s0 + $0x30] sm:$0xf]
    %v61 = vld [vmem:[%s0 + $0x34] sm:$0xf]
    %v62 = vld [vmem:[%s0 + $0x38] sm:$0xf]
    %v63 = vld [vmem:[%s0 + $0x3c] sm:$0xf]
    %v64 = vld [vmem:[%s0 + $0x40] sm:$0xf]
    %v65 = vld [vmem:[%s0 + $0x44] sm:$0xf]
    %v66 = vld [vmem:[%s0 + $0x48] sm:$0xf]
    %v67 = vld [vmem:[%s0 + $0x4c] sm:$0xf]
    %v68 = vld [vmem:[%s0 + $0x50] sm:$0xf]
    %v69 = vld [vmem:[%s0 + $0x54] sm:$0xf]
    %v70 = vld [vmem:[%s0 + $0x58] sm:$0xf]
    %v71 = vld [vmem:[%s0 + $0x5c] sm:$0xf]
    %v72 = vld [vmem:[%s0 + $0x60] sm:$0xf]
    %v73 = vld [vmem:[%s0 + $0x64] sm:$0xf]
    %v74 = vld [vmem:[%s0 + $0x68] sm:$0xf]
    %v75 = vld [vmem:[%s0 + $0x6c] sm:$0xf]
    %v76 = vld [vmem:[%s0 + $0x70] sm:$0xf]
    %v77 = vld [vmem:[%s0 + $0x74] sm:$0xf]
    %v78 = vld [vmem:[%s0 + $0x78] sm:$0xf]
    %v79 = vld [vmem:[%s0 + $0x7c] sm:$0xf]
    %v80 = vld [vmem:[%s0 + $0x80] sm:$0xf]
    %v81 = vld [vmem:[%s0 + $0x84] sm:$0xf]
    %v82 = vld [vmem:[%s0 + $0x88] sm:$0xf]
    %v83 = vld [vmem:[%s0 + $0x8c] sm:$0xf]
    %v84 = vld [vmem:[%s0 + $0x90] sm:$0xf]
    %v85 = vld [vmem:[%s0 + $0x94] sm:$0xf]
    %v86 = vld [vmem:[%s0 + $0x98] sm:$0xf]
    %v87 = vld [vmem:[%s0 + $0x9c] sm:$0xf]
    %v88 = vld [vmem:[%s0 + $0xa0] sm:$0xf]
    %v89 = vld [vmem:[%s0 + $0xa4] sm:$0xf]
    %v90 = vld [vmem:[%s0 + $0xa8] sm:$0xf]
    %v91 = vld [vmem:[%s0 + $0xac] sm:$0xf]
    %v92 = vld [vmem:[%s0 + $0xb0] sm:$0xf]
    %v93 = vld [vmem:[%s0 + $0xb4] sm:$0xf]
    %v94 = vld [vmem:[%s0 + $0xb8] sm:$0xf]
    %v95 = vld [vmem:[%s0 + $0xbc] sm:$0xf]
    %v96 = vld [vmem:[%s0 + $0xc0] sm:$0xf]
    %v97 = vld [vmem:[%s0 + $0xc4] sm:$0xf]
    %v98 = vld [vmem:[%s0 + $0xc8] sm:$0xf]
    %v99 = vld [vmem:[%s0 + $0xcc] sm:$0xf]
    %v100 = vld [vmem:[%s0 + $0xd0] sm:$0xf]
    %v101 = vld [vmem:[%s0 + $0xd4] sm:$0xf]
    %v102 = vld [vmem:[%s0 + $0xd8] sm:$0xf]
    %v103 = vld [vmem:[%s0 + $0xdc] sm:$0xf]
    %v104 = vld [vmem:[%s0 + $0xe0] sm:$0xf]
    %v105 = vld [vmem:[%s0 + $0xe4] sm:$0xf]
    %v106 = vld [vmem:[%s0 + $0xe8] sm:$0xf]
    %v107 = vld [vmem:[%s0 + $0xec] sm:$0xf]
    %v108 = vld [vmem:[%s0 + $0xf0] sm:$0xf]
    %v109 = vld [vmem:[%s0 + $0xf4] sm:$0xf]
    %v110 = vld [vmem:[%s0 + $0xf8] sm:$0xf]
    %v111 = vld [vmem:[%s0 + $0xfc] sm:$0xf]
    %v112 = vld [vmem:[%s3] sm:$0x3]
    %v113 = vld [vmem:[%s6] sm:$0x1]
    %v115 = vlaneseq
    %v116 = vshrl.u32 %v115, 7
    %v117 = vsub.s32 0, %v116
    %v118 = vrot.slane %v113, %v117
    %v184 = vunpack.c.l.b16 %v48
    %v185 = vunpack.c.l.b16 %v49
    %v186 = vunpack.c.l.b16 %v50
    %v187 = vunpack.c.l.b16 %v51
    %v188 = vunpack.c.l.b16 %v52
    %v189 = vunpack.c.l.b16 %v53
    %v190 = vunpack.c.l.b16 %v54
    %v191 = vunpack.c.l.b16 %v55
    %v192 = vunpack.c.l.b16 %v56
    %v193 = vunpack.c.l.b16 %v57
    %v194 = vunpack.c.l.b16 %v58
    %v195 = vunpack.c.l.b16 %v59
    %v196 = vunpack.c.l.b16 %v60
    %v197 = vunpack.c.l.b16 %v61
    %v198 = vunpack.c.l.b16 %v62
    %v199 = vunpack.c.l.b16 %v63
    %v200 = vunpack.c.l.b16 %v64
    %v201 = vunpack.c.l.b16 %v65
    %v202 = vunpack.c.l.b16 %v66
    %v203 = vunpack.c.l.b16 %v67
    %v204 = vunpack.c.l.b16 %v68
    %v205 = vunpack.c.l.b16 %v69
    %v206 = vunpack.c.l.b16 %v70
    %v207 = vunpack.c.l.b16 %v71
    %v208 = vunpack.c.l.b16 %v72
    %v209 = vunpack.c.l.b16 %v73
    %v210 = vunpack.c.l.b16 %v74
    %v211 = vunpack.c.l.b16 %v75
    %v212 = vunpack.c.l.b16 %v76
    %v213 = vunpack.c.l.b16 %v77
    %v214 = vunpack.c.l.b16 %v78
    %v215 = vunpack.c.l.b16 %v79
    %v216 = vunpack.c.l.b16 %v80
    %v217 = vunpack.c.l.b16 %v81
    %v218 = vunpack.c.l.b16 %v82
    %v219 = vunpack.c.l.b16 %v83
    %v220 = vunpack.c.l.b16 %v84
    %v221 = vunpack.c.l.b16 %v85
    %v222 = vunpack.c.l.b16 %v86
    %v223 = vunpack.c.l.b16 %v87
    %v224 = vunpack.c.l.b16 %v88
    %v225 = vunpack.c.l.b16 %v89
    %v226 = vunpack.c.l.b16 %v90
    %v227 = vunpack.c.l.b16 %v91
    %v228 = vunpack.c.l.b16 %v92
    %v229 = vunpack.c.l.b16 %v93
    %v230 = vunpack.c.l.b16 %v94
    %v231 = vunpack.c.l.b16 %v95
    %v232 = vunpack.c.l.b16 %v96
    %v233 = vunpack.c.l.b16 %v97
    %v234 = vunpack.c.l.b16 %v98
    %v235 = vunpack.c.l.b16 %v99
    %v236 = vunpack.c.l.b16 %v100
    %v237 = vunpack.c.l.b16 %v101
    %v238 = vunpack.c.l.b16 %v102
    %v239 = vunpack.c.l.b16 %v103
    %v240 = vunpack.c.l.b16 %v104
    %v241 = vunpack.c.l.b16 %v105
    %v242 = vunpack.c.l.b16 %v106
    %v243 = vunpack.c.l.b16 %v107
    %v244 = vunpack.c.l.b16 %v108
    %v245 = vunpack.c.l.b16 %v109
    %v246 = vunpack.c.l.b16 %v110
    %v247 = vunpack.c.l.b16 %v111
    %v248 = vpack.c.b16 %v185, %v184
    %v249 = vpack.c.b16 %v187, %v186
    %v250 = vpack.c.b16 %v189, %v188
    %v251 = vpack.c.b16 %v191, %v190
    %v252 = vpack.c.b16 %v193, %v192
    %v253 = vpack.c.b16 %v195, %v194
    %v254 = vpack.c.b16 %v197, %v196
    %v255 = vpack.c.b16 %v199, %v198
    %v256 = vpack.c.b16 %v201, %v200
    %v257 = vpack.c.b16 %v203, %v202
    %v258 = vpack.c.b16 %v205, %v204
    %v259 = vpack.c.b16 %v207, %v206
    %v260 = vpack.c.b16 %v209, %v208
    %v261 = vpack.c.b16 %v211, %v210
    %v262 = vpack.c.b16 %v213, %v212
    %v263 = vpack.c.b16 %v215, %v214
    %v264 = vpack.c.b16 %v217, %v216
    %v265 = vpack.c.b16 %v219, %v218
    %v266 = vpack.c.b16 %v221, %v220
    %v267 = vpack.c.b16 %v223, %v222
    %v268 = vpack.c.b16 %v225, %v224
    %v269 = vpack.c.b16 %v227, %v226
    %v270 = vpack.c.b16 %v229, %v228
    %v271 = vpack.c.b16 %v231, %v230
    %v272 = vpack.c.b16 %v233, %v232
    %v273 = vpack.c.b16 %v235, %v234
    %v274 = vpack.c.b16 %v237, %v236
    %v275 = vpack.c.b16 %v239, %v238
    %v276 = vpack.c.b16 %v241, %v240
    %v277 = vpack.c.b16 %v243, %v242
    %v278 = vpack.c.b16 %v245, %v244
    %v279 = vpack.c.b16 %v247, %v246
    %vm280 = vcmask 31744
    %v282 = vsel %vm280, %v248, 0
    %v285 = vsel %vm280, %v249, 0
    %v288 = vsel %vm280, %v250, 0
    %v291 = vsel %vm280, %v251, 0
    %v294 = vsel %vm280, %v252, 0
    %v297 = vsel %vm280, %v253, 0
    %v300 = vsel %vm280, %v254, 0
    %v303 = vsel %vm280, %v255, 0
    %v306 = vsel %vm280, %v256, 0
    %v309 = vsel %vm280, %v257, 0
    %v312 = vsel %vm280, %v258, 0
    %v315 = vsel %vm280, %v259, 0
    %v318 = vsel %vm280, %v260, 0
    %v321 = vsel %vm280, %v261, 0
    %v324 = vsel %vm280, %v262, 0
    %v327 = vsel %vm280, %v263, 0
    %v330 = vsel %vm280, %v264, 0
    %v333 = vsel %vm280, %v265, 0
    %v336 = vsel %vm280, %v266, 0
    %v339 = vsel %vm280, %v267, 0
    %v342 = vsel %vm280, %v268, 0
    %v345 = vsel %vm280, %v269, 0
    %v348 = vsel %vm280, %v270, 0
    %v351 = vsel %vm280, %v271, 0
    %v354 = vsel %vm280, %v272, 0
    %v357 = vsel %vm280, %v273, 0
    %v360 = vsel %vm280, %v274, 0
    %v363 = vsel %vm280, %v275, 0
    %v366 = vsel %vm280, %v276, 0
    %v369 = vsel %vm280, %v277, 0
    %v372 = vsel %vm280, %v278, 0
    %v375 = vsel %vm280, %v279, 0
    %vm377 = vcmask 1041408
    %v379 = vsel %vm377, %v112, 0
    %381 = vmatprep.subr.bf16.mxu0 0
    %382 = vmatpush1.bf16.msra.mxu0 %v379
    %383 = vmatprep.subr.bf16.mxu0 0
    %384 = vmatpush1.bf16.msra.mxu0 0
    %385 = vmatprep.subr.bf16.mxu0 0
    %386 = vmatpush1.bf16.msra.mxu0 0
    %387 = vmatprep.subr.bf16.mxu0 0
    %388 = vmatpush1.bf16.msra.mxu0 0
    %389 = vmatprep.subr.bf16.mxu0 0
    %390 = vmatpush1.bf16.msra.mxu0 0
    %391 = vmatprep.subr.bf16.mxu0 0
    %392 = vmatpush1.bf16.msra.mxu0 0
    %393 = vmatprep.subr.bf16.mxu0 0
    %394 = vmatpush1.bf16.msra.mxu0 0
    %395 = vmatprep.subr.bf16.mxu0 0
    %396 = vmatpush1.bf16.msra.mxu0 0
    %397 = vmatprep.subr.bf16.mxu0 0
    %398 = vmatpush1.bf16.msra.mxu0 0
    %399 = vmatprep.subr.bf16.mxu0 0
    %400 = vmatpush1.bf16.msra.mxu0 0
    %401 = vmatprep.subr.bf16.mxu0 0
    %402 = vmatpush1.bf16.msra.mxu0 0
    %403 = vmatprep.subr.bf16.mxu0 0
    %404 = vmatpush1.bf16.msra.mxu0 0
    %405 = vmatprep.subr.bf16.mxu0 0
    %406 = vmatpush1.bf16.msra.mxu0 0
    %407 = vmatprep.subr.bf16.mxu0 0
    %408 = vmatpush1.bf16.msra.mxu0 0
    %409 = vmatprep.subr.bf16.mxu0 0
    %410 = vmatpush1.bf16.msra.mxu0 0
    %411 = vmatprep.subr.bf16.mxu0 0
    %412 = vmatpush1.bf16.msra.mxu0 0
    %413 = vmatprep.mubr.bf16.mxu0 0
    %414 = vmatmul.mubr.bf16.gmra.mrb[0].mxu0 %v282
    %v415 = vpop.f32.mrb[0].mxu0
    %v416 = vadd.f32 %v118, %v415
    %v417 = vpop.f32.mrb[0].mxu0
    %v418 = vpop.f32.mrb[0].mxu0
    %v419 = vadd.f32 %v118, %v418
    %v420 = vpop.f32.mrb[0].mxu0
    %421 = vmatprep.mubr.bf16.mxu0 0
    %422 = vmatmul.mubr.bf16.gmra.mrb[0].mxu0 %v285
    %v423 = vpop.f32.mrb[0].mxu0
    %v424 = vadd.f32 %v118, %v423
    %v425 = vpop.f32.mrb[0].mxu0
    %v426 = vpop.f32.mrb[0].mxu0
    %v427 = vadd.f32 %v118, %v426
    %v428 = vpop.f32.mrb[0].mxu0
    %429 = vmatprep.mubr.bf16.mxu0 0
    %430 = vmatmul.mubr.bf16.gmra.mrb[0].mxu0 %v288
    %v431 = vpop.f32.mrb[0].mxu0
    %v432 = vadd.f32 %v118, %v431
    %v433 = vpop.f32.mrb[0].mxu0
    %v434 = vpop.f32.mrb[0].mxu0
    %v435 = vadd.f32 %v118, %v434
    %v436 = vpop.f32.mrb[0].mxu0
    %437 = vmatprep.mubr.bf16.mxu0 0
    %438 = vmatmul.mubr.bf16.gmra.mrb[0].mxu0 %v291
    %v439 = vpop.f32.mrb[0].mxu0
    %v440 = vadd.f32 %v118, %v439
    %v441 = vpop.f32.mrb[0].mxu0
    %v442 = vpop.f32.mrb[0].mxu0
    %v443 = vadd.f32 %v118, %v442
    %v444 = vpop.f32.mrb[0].mxu0
    %445 = vmatprep.mubr.bf16.mxu0 0
    %446 = vmatmul.mubr.bf16.gmra.mrb[0].mxu0 %v294
    %v447 = vpop.f32.mrb[0].mxu0
    %v448 = vadd.f32 %v118, %v447
    %v449 = vpop.f32.mrb[0].mxu0
    %v450 = vpop.f32.mrb[0].mxu0
    %v451 = vadd.f32 %v118, %v450
    %v452 = vpop.f32.mrb[0].mxu0
    %453 = vmatprep.mubr.bf16.mxu0 0
    %454 = vmatmul.mubr.bf16.gmra.mrb[0].mxu0 %v297
    %v455 = vpop.f32.mrb[0].mxu0
    %v456 = vadd.f32 %v118, %v455
    %v457 = vpop.f32.mrb[0].mxu0
    %v458 = vpop.f32.mrb[0].mxu0
    %v459 = vadd.f32 %v118, %v458
    %v460 = vpop.f32.mrb[0].mxu0
    %461 = vmatprep.mubr.bf16.mxu0 0
    %462 = vmatmul.mubr.bf16.gmra.mrb[0].mxu0 %v300
    %v463 = vpop.f32.mrb[0].mxu0
    %v464 = vadd.f32 %v118, %v463
    %v465 = vpop.f32.mrb[0].mxu0
    %v466 = vpop.f32.mrb[0].mxu0
    %v467 = vadd.f32 %v118, %v466
    %v468 = vpop.f32.mrb[0].mxu0
    %469 = vmatprep.mubr.bf16.mxu0 0
    %470 = vmatmul.mubr.bf16.gmra.mrb[0].mxu0 %v303
    %v471 = vpop.f32.mrb[0].mxu0
    %v472 = vadd.f32 %v118, %v471
    %v473 = vpop.f32.mrb[0].mxu0
    %v474 = vpop.f32.mrb[0].mxu0
    %v475 = vadd.f32 %v118, %v474
    %v476 = vpop.f32.mrb[0].mxu0
    %477 = vmatprep.mubr.bf16.mxu0 0
    %478 = vmatmul.mubr.bf16.gmra.mrb[0].mxu0 %v306
    %v479 = vpop.f32.mrb[0].mxu0
    %v480 = vadd.f32 %v118, %v479
    %v481 = vpop.f32.mrb[0].mxu0
    %v482 = vpop.f32.mrb[0].mxu0
    %v483 = vadd.f32 %v118, %v482
    %v484 = vpop.f32.mrb[0].mxu0
    %485 = vmatprep.mubr.bf16.mxu0 0
    %486 = vmatmul.mubr.bf16.gmra.mrb[0].mxu0 %v309
    %v487 = vpop.f32.mrb[0].mxu0
    %v488 = vadd.f32 %v118, %v487
    %v489 = vpop.f32.mrb[0].mxu0
    %v490 = vpop.f32.mrb[0].mxu0
    %v491 = vadd.f32 %v118, %v490
    %v492 = vpop.f32.mrb[0].mxu0
    %493 = vmatprep.mubr.bf16.mxu0 0
    %494 = vmatmul.mubr.bf16.gmra.mrb[0].mxu0 %v312
    %v495 = vpop.f32.mrb[0].mxu0
    %v496 = vadd.f32 %v118, %v495
    %v497 = vpop.f32.mrb[0].mxu0
    %v498 = vpop.f32.mrb[0].mxu0
    %v499 = vadd.f32 %v118, %v498
    %v500 = vpop.f32.mrb[0].mxu0
    %501 = vmatprep.mubr.bf16.mxu0 0
    %502 = vmatmul.mubr.bf16.gmra.mrb[0].mxu0 %v315
    %v503 = vpop.f32.mrb[0].mxu0
    %v504 = vadd.f32 %v118, %v503
    %v505 = vpop.f32.mrb[0].mxu0
    %v506 = vpop.f32.mrb[0].mxu0
    %v507 = vadd.f32 %v118, %v506
    %v508 = vpop.f32.mrb[0].mxu0
    %509 = vmatprep.mubr.bf16.mxu0 0
    %510 = vmatmul.mubr.bf16.gmra.mrb[0].mxu0 %v318
    %v511 = vpop.f32.mrb[0].mxu0
    %v512 = vadd.f32 %v118, %v511
    %v513 = vpop.f32.mrb[0].mxu0
    %v514 = vpop.f32.mrb[0].mxu0
    %v515 = vadd.f32 %v118, %v514
    %v516 = vpop.f32.mrb[0].mxu0
    %517 = vmatprep.mubr.bf16.mxu0 0
    %518 = vmatmul.mubr.bf16.gmra.mrb[0].mxu0 %v321
    %v519 = vpop.f32.mrb[0].mxu0
    %v520 = vadd.f32 %v118, %v519
    %v521 = vpop.f32.mrb[0].mxu0
    %v522 = vpop.f32.mrb[0].mxu0
    %v523 = vadd.f32 %v118, %v522
    %v524 = vpop.f32.mrb[0].mxu0
    %525 = vmatprep.mubr.bf16.mxu0 0
    %526 = vmatmul.mubr.bf16.gmra.mrb[0].mxu0 %v324
    %v527 = vpop.f32.mrb[0].mxu0
    %v528 = vadd.f32 %v118, %v527
    %v529 = vpop.f32.mrb[0].mxu0
    %v530 = vpop.f32.mrb[0].mxu0
    %v531 = vadd.f32 %v118, %v530
    %v532 = vpop.f32.mrb[0].mxu0
    %533 = vmatprep.mubr.bf16.mxu0 0
    %534 = vmatmul.mubr.bf16.gmra.mrb[0].mxu0 %v327
    %v535 = vpop.f32.mrb[0].mxu0
    %v536 = vadd.f32 %v118, %v535
    %v537 = vpop.f32.mrb[0].mxu0
    %v538 = vpop.f32.mrb[0].mxu0
    %v539 = vadd.f32 %v118, %v538
    %v540 = vpop.f32.mrb[0].mxu0
    %541 = vmatprep.mubr.bf16.mxu0 0
    %542 = vmatmul.mubr.bf16.gmra.mrb[0].mxu0 %v330
    %v543 = vpop.f32.mrb[0].mxu0
    %v544 = vadd.f32 %v118, %v543
    %v545 = vpop.f32.mrb[0].mxu0
    %v546 = vpop.f32.mrb[0].mxu0
    %v547 = vadd.f32 %v118, %v546
    %v548 = vpop.f32.mrb[0].mxu0
    %549 = vmatprep.mubr.bf16.mxu0 0
    %550 = vmatmul.mubr.bf16.gmra.mrb[0].mxu0 %v333
    %v551 = vpop.f32.mrb[0].mxu0
    %v552 = vadd.f32 %v118, %v551
    %v553 = vpop.f32.mrb[0].mxu0
    %v554 = vpop.f32.mrb[0].mxu0
    %v555 = vadd.f32 %v118, %v554
    %v556 = vpop.f32.mrb[0].mxu0
    %557 = vmatprep.mubr.bf16.mxu0 0
    %558 = vmatmul.mubr.bf16.gmra.mrb[0].mxu0 %v336
    %v559 = vpop.f32.mrb[0].mxu0
    %v560 = vadd.f32 %v118, %v559
    %v561 = vpop.f32.mrb[0].mxu0
    %v562 = vpop.f32.mrb[0].mxu0
    %v563 = vadd.f32 %v118, %v562
    %v564 = vpop.f32.mrb[0].mxu0
    %565 = vmatprep.mubr.bf16.mxu0 0
    %566 = vmatmul.mubr.bf16.gmra.mrb[0].mxu0 %v339
    %v567 = vpop.f32.mrb[0].mxu0
    %v568 = vadd.f32 %v118, %v567
    %v569 = vpop.f32.mrb[0].mxu0
    %v570 = vpop.f32.mrb[0].mxu0
    %v571 = vadd.f32 %v118, %v570
    %v572 = vpop.f32.mrb[0].mxu0
    %573 = vmatprep.mubr.bf16.mxu0 0
    %574 = vmatmul.mubr.bf16.gmra.mrb[0].mxu0 %v342
    %v575 = vpop.f32.mrb[0].mxu0
    %v576 = vadd.f32 %v118, %v575
    %v577 = vpop.f32.mrb[0].mxu0
    %v578 = vpop.f32.mrb[0].mxu0
    %v579 = vadd.f32 %v118, %v578
    %v580 = vpop.f32.mrb[0].mxu0
    %581 = vmatprep.mubr.bf16.mxu0 0
    %582 = vmatmul.mubr.bf16.gmra.mrb[0].mxu0 %v345
    %v583 = vpop.f32.mrb[0].mxu0
    %v584 = vadd.f32 %v118, %v583
    %v585 = vpop.f32.mrb[0].mxu0
    %v586 = vpop.f32.mrb[0].mxu0
    %v587 = vadd.f32 %v118, %v586
    %v588 = vpop.f32.mrb[0].mxu0
    %589 = vmatprep.mubr.bf16.mxu0 0
    %590 = vmatmul.mubr.bf16.gmra.mrb[0].mxu0 %v348
    %v591 = vpop.f32.mrb[0].mxu0
    %v592 = vadd.f32 %v118, %v591
    %v593 = vpop.f32.mrb[0].mxu0
    %v594 = vpop.f32.mrb[0].mxu0
    %v595 = vadd.f32 %v118, %v594
    %v596 = vpop.f32.mrb[0].mxu0
    %597 = vmatprep.mubr.bf16.mxu0 0
    %598 = vmatmul.mubr.bf16.gmra.mrb[0].mxu0 %v351
    %v599 = vpop.f32.mrb[0].mxu0
    %v600 = vadd.f32 %v118, %v599
    %v601 = vpop.f32.mrb[0].mxu0
    %v602 = vpop.f32.mrb[0].mxu0
    %v603 = vadd.f32 %v118, %v602
    %v604 = vpop.f32.mrb[0].mxu0
    %605 = vmatprep.mubr.bf16.mxu0 0
    %606 = vmatmul.mubr.bf16.gmra.mrb[0].mxu0 %v354
    %v607 = vpop.f32.mrb[0].mxu0
    %v608 = vadd.f32 %v118, %v607
    %v609 = vpop.f32.mrb[0].mxu0
    %v610 = vpop.f32.mrb[0].mxu0
    %v611 = vadd.f32 %v118, %v610
    %v612 = vpop.f32.mrb[0].mxu0
    %613 = vmatprep.mubr.bf16.mxu0 0
    %614 = vmatmul.mubr.bf16.gmra.mrb[0].mxu0 %v357
    %v615 = vpop.f32.mrb[0].mxu0
    %v616 = vadd.f32 %v118, %v615
    %v617 = vpop.f32.mrb[0].mxu0
    %v618 = vpop.f32.mrb[0].mxu0
    %v619 = vadd.f32 %v118, %v618
    %v620 = vpop.f32.mrb[0].mxu0
    %621 = vmatprep.mubr.bf16.mxu0 0
    %622 = vmatmul.mubr.bf16.gmra.mrb[0].mxu0 %v360
    %v623 = vpop.f32.mrb[0].mxu0
    %v624 = vadd.f32 %v118, %v623
    %v625 = vpop.f32.mrb[0].mxu0
    %v626 = vpop.f32.mrb[0].mxu0
    %v627 = vadd.f32 %v118, %v626
    %v628 = vpop.f32.mrb[0].mxu0
    %629 = vmatprep.mubr.bf16.mxu0 0
    %630 = vmatmul.mubr.bf16.gmra.mrb[0].mxu0 %v363
    %v631 = vpop.f32.mrb[0].mxu0
    %v632 = vadd.f32 %v118, %v631
    %v633 = vpop.f32.mrb[0].mxu0
    %v634 = vpop.f32.mrb[0].mxu0
    %v635 = vadd.f32 %v118, %v634
    %v636 = vpop.f32.mrb[0].mxu0
    %637 = vmatprep.mubr.bf16.mxu0 0
    %638 = vmatmul.mubr.bf16.gmra.mrb[0].mxu0 %v366
    %v639 = vpop.f32.mrb[0].mxu0
    %v640 = vadd.f32 %v118, %v639
    %v641 = vpop.f32.mrb[0].mxu0
    %v642 = vpop.f32.mrb[0].mxu0
    %v643 = vadd.f32 %v118, %v642
    %v644 = vpop.f32.mrb[0].mxu0
    %645 = vmatprep.mubr.bf16.mxu0 0
    %646 = vmatmul.mubr.bf16.gmra.mrb[0].mxu0 %v369
    %v647 = vpop.f32.mrb[0].mxu0
    %v648 = vadd.f32 %v118, %v647
    %v649 = vpop.f32.mrb[0].mxu0
    %v650 = vpop.f32.mrb[0].mxu0
    %v651 = vadd.f32 %v118, %v650
    %v652 = vpop.f32.mrb[0].mxu0
    %653 = vmatprep.mubr.bf16.mxu0 0
    %654 = vmatmul.mubr.bf16.gmra.mrb[0].mxu0 %v372
    %v655 = vpop.f32.mrb[0].mxu0
    %v656 = vadd.f32 %v118, %v655
    %v657 = vpop.f32.mrb[0].mxu0
    %v658 = vpop.f32.mrb[0].mxu0
    %v659 = vadd.f32 %v118, %v658
    %v660 = vpop.f32.mrb[0].mxu0
    %661 = vmatprep.mubr.bf16.mxu0 0
    %662 = vmatmul.mubr.bf16.gmra.mrb[0].mxu0 %v375
    %v663 = vpop.f32.mrb[0].mxu0
    %v664 = vadd.f32 %v118, %v663
    %v665 = vpop.f32.mrb[0].mxu0
    %v666 = vpop.f32.mrb[0].mxu0
    %v667 = vadd.f32 %v118, %v666
    %v668 = vpop.f32.mrb[0].mxu0
    %669 = vdwg.mxu0
    %v670 = vmax.f32 %v416, 0.0
    %v671 = vmax.f32 %v419, 0.0
    %v672 = vmax.f32 %v424, 0.0
    %v673 = vmax.f32 %v427, 0.0
    %v674 = vmax.f32 %v432, 0.0
    %v675 = vmax.f32 %v435, 0.0
    %v676 = vmax.f32 %v440, 0.0
    %v677 = vmax.f32 %v443, 0.0
    %v678 = vmax.f32 %v448, 0.0
    %v679 = vmax.f32 %v451, 0.0
    %v680 = vmax.f32 %v456, 0.0
    %v681 = vmax.f32 %v459, 0.0
    %v682 = vmax.f32 %v464, 0.0
    %v683 = vmax.f32 %v467, 0.0
    %v684 = vmax.f32 %v472, 0.0
    %v685 = vmax.f32 %v475, 0.0
    %v686 = vmax.f32 %v480, 0.0
    %v687 = vmax.f32 %v483, 0.0
    %v688 = vmax.f32 %v488, 0.0
    %v689 = vmax.f32 %v491, 0.0
    %v690 = vmax.f32 %v496, 0.0
    %v691 = vmax.f32 %v499, 0.0
    %v692 = vmax.f32 %v504, 0.0
    %v693 = vmax.f32 %v507, 0.0
    %v694 = vmax.f32 %v512, 0.0
    %v695 = vmax.f32 %v515, 0.0
    %v696 = vmax.f32 %v520, 0.0
    %v697 = vmax.f32 %v523, 0.0
    %v698 = vmax.f32 %v528, 0.0
    %v699 = vmax.f32 %v531, 0.0
    %v700 = vmax.f32 %v536, 0.0
    %v701 = vmax.f32 %v539, 0.0
    %v702 = vmax.f32 %v544, 0.0
    %v703 = vmax.f32 %v547, 0.0
    %v704 = vmax.f32 %v552, 0.0
    %v705 = vmax.f32 %v555, 0.0
    %v706 = vmax.f32 %v560, 0.0
    %v707 = vmax.f32 %v563, 0.0
    %v708 = vmax.f32 %v568, 0.0
    %v709 = vmax.f32 %v571, 0.0
    %v710 = vmax.f32 %v576, 0.0
    %v711 = vmax.f32 %v579, 0.0
    %v712 = vmax.f32 %v584, 0.0
    %v713 = vmax.f32 %v587, 0.0
    %v714 = vmax.f32 %v592, 0.0
    %v715 = vmax.f32 %v595, 0.0
    %v716 = vmax.f32 %v600, 0.0
    %v717 = vmax.f32 %v603, 0.0
    %v718 = vmax.f32 %v608, 0.0
    %v719 = vmax.f32 %v611, 0.0
    %v720 = vmax.f32 %v616, 0.0
    %v721 = vmax.f32 %v619, 0.0
    %v722 = vmax.f32 %v624, 0.0
    %v723 = vmax.f32 %v627, 0.0
    %v724 = vmax.f32 %v632, 0.0
    %v725 = vmax.f32 %v635, 0.0
    %v726 = vmax.f32 %v640, 0.0
    %v727 = vmax.f32 %v643, 0.0
    %v728 = vmax.f32 %v648, 0.0
    %v729 = vmax.f32 %v651, 0.0
    %v730 = vmax.f32 %v656, 0.0
    %v731 = vmax.f32 %v659, 0.0
    %v732 = vmax.f32 %v664, 0.0
    %v733 = vmax.f32 %v667, 0.0
    %v734 = vld [vmem:[#allocation2] sm:$0x3]
    %vm735 = vcmask 261120
    %v736 = vsel %vm735, %v670, 0.0
    %v737 = vsel %vm735, %v671, 0.0
    %v738 = vadd.f32 %v736, %v737
    %v739 = vsel %vm735, %v672, 0.0
    %v740 = vadd.f32 %v738, %v739
    %v741 = vsel %vm735, %v673, 0.0
    %v742 = vadd.f32 %v740, %v741
    %v743 = vsel %vm735, %v674, 0.0
    %v744 = vadd.f32 %v742, %v743
    %v745 = vsel %vm735, %v675, 0.0
    %v746 = vadd.f32 %v744, %v745
    %v747 = vsel %vm735, %v676, 0.0
    %v748 = vadd.f32 %v746, %v747
    %v749 = vsel %vm735, %v677, 0.0
    %v750 = vadd.f32 %v748, %v749
    %v751 = vsel %vm735, %v678, 0.0
    %v752 = vadd.f32 %v750, %v751
    %v753 = vsel %vm735, %v679, 0.0
    %v754 = vadd.f32 %v752, %v753
    %v755 = vsel %vm735, %v680, 0.0
    %v756 = vadd.f32 %v754, %v755
    %v757 = vsel %vm735, %v681, 0.0
    %v758 = vadd.f32 %v756, %v757
    %v759 = vsel %vm735, %v682, 0.0
    %v760 = vadd.f32 %v758, %v759
    %v761 = vsel %vm735, %v683, 0.0
    %v762 = vadd.f32 %v760, %v761
    %v763 = vsel %vm735, %v684, 0.0
    %v764 = vadd.f32 %v762, %v763
    %v765 = vsel %vm735, %v685, 0.0
    %v766 = vadd.f32 %v764, %v765
    %v767 = vsel %vm735, %v686, 0.0
    %v768 = vadd.f32 %v766, %v767
    %v769 = vsel %vm735, %v687, 0.0
    %v770 = vadd.f32 %v768, %v769
    %v771 = vsel %vm735, %v688, 0.0
    %v772 = vadd.f32 %v770, %v771
    %v773 = vsel %vm735, %v689, 0.0
    %v774 = vadd.f32 %v772, %v773
    %v775 = vsel %vm735, %v690, 0.0
    %v776 = vadd.f32 %v774, %v775
    %v777 = vsel %vm735, %v691, 0.0
    %v778 = vadd.f32 %v776, %v777
    %v779 = vsel %vm735, %v692, 0.0
    %v780 = vadd.f32 %v778, %v779
    %v781 = vsel %vm735, %v693, 0.0
    %v782 = vadd.f32 %v780, %v781
    %v783 = vsel %vm735, %v694, 0.0
    %v784 = vadd.f32 %v782, %v783
    %v785 = vsel %vm735, %v695, 0.0
    %v786 = vadd.f32 %v784, %v785
    %v787 = vsel %vm735, %v696, 0.0
    %v788 = vadd.f32 %v786, %v787
    %v789 = vsel %vm735, %v697, 0.0
    %v790 = vadd.f32 %v788, %v789
    %v791 = vsel %vm735, %v698, 0.0
    %v792 = vadd.f32 %v790, %v791
    %v793 = vsel %vm735, %v699, 0.0
    %v794 = vadd.f32 %v792, %v793
    %v795 = vsel %vm735, %v700, 0.0
    %v796 = vadd.f32 %v794, %v795
    %v797 = vsel %vm735, %v701, 0.0
    %v798 = vadd.f32 %v796, %v797
    %v799 = vrot.slane %v798, 4
    %v800 = vadd.f32 %v798, %v799
    %v801 = vrot.slane %v800, 2
    %v802 = vadd.f32 %v800, %v801
    %v803 = vrot.slane %v802, 1
    %v804 = vadd.f32 %v802, %v803
    %v805 = vsel %vm735, %v702, 0.0
    %v806 = vsel %vm735, %v703, 0.0
    %v807 = vadd.f32 %v805, %v806
    %v808 = vsel %vm735, %v704, 0.0
    %v809 = vadd.f32 %v807, %v808
    %v810 = vsel %vm735, %v705, 0.0
    %v811 = vadd.f32 %v809, %v810
    %v812 = vsel %vm735, %v706, 0.0
    %v813 = vadd.f32 %v811, %v812
    %v814 = vsel %vm735, %v707, 0.0
    %v815 = vadd.f32 %v813, %v814
    %v816 = vsel %vm735, %v708, 0.0
    %v817 = vadd.f32 %v815, %v816
    %v818 = vsel %vm735, %v709, 0.0
    %v819 = vadd.f32 %v817, %v818
    %v820 = vsel %vm735, %v710, 0.0
    %v821 = vadd.f32 %v819, %v820
    %v822 = vsel %vm735, %v711, 0.0
    %v823 = vadd.f32 %v821, %v822
    %v824 = vsel %vm735, %v712, 0.0
    %v825 = vadd.f32 %v823, %v824
    %v826 = vsel %vm735, %v713, 0.0
    %v827 = vadd.f32 %v825, %v826
    %v828 = vsel %vm735, %v714, 0.0
    %v829 = vadd.f32 %v827, %v828
    %v830 = vsel %vm735, %v715, 0.0
    %v831 = vadd.f32 %v829, %v830
    %v832 = vsel %vm735, %v716, 0.0
    %v833 = vadd.f32 %v831, %v832
    %v834 = vsel %vm735, %v717, 0.0
    %v835 = vadd.f32 %v833, %v834
    %v836 = vsel %vm735, %v718, 0.0
    %v837 = vadd.f32 %v835, %v836
    %v838 = vsel %vm735, %v719, 0.0
    %v839 = vadd.f32 %v837, %v838
    %v840 = vsel %vm735, %v720, 0.0
    %v841 = vadd.f32 %v839, %v840
    %v842 = vsel %vm735, %v721, 0.0
    %v843 = vadd.f32 %v841, %v842
    %v844 = vsel %vm735, %v722, 0.0
    %v845 = vadd.f32 %v843, %v844
    %v846 = vsel %vm735, %v723, 0.0
    %v847 = vadd.f32 %v845, %v846
    %v848 = vsel %vm735, %v724, 0.0
    %v849 = vadd.f32 %v847, %v848
    %v850 = vsel %vm735, %v725, 0.0
    %v851 = vadd.f32 %v849, %v850
    %v852 = vsel %vm735, %v726, 0.0
    %v853 = vadd.f32 %v851, %v852
    %v854 = vsel %vm735, %v727, 0.0
    %v855 = vadd.f32 %v853, %v854
    %v856 = vsel %vm735, %v728, 0.0
    %v857 = vadd.f32 %v855, %v856
    %v858 = vsel %vm735, %v729, 0.0
    %v859 = vadd.f32 %v857, %v858
    %v860 = vsel %vm735, %v730, 0.0
    %v861 = vadd.f32 %v859, %v860
    %v862 = vsel %vm735, %v731, 0.0
    %v863 = vadd.f32 %v861, %v862
    %v864 = vsel %vm735, %v732, 0.0
    %v865 = vadd.f32 %v863, %v864
    %v866 = vsel %vm735, %v733, 0.0
    %v867 = vadd.f32 %v865, %v866
    %v868 = vrot.slane %v867, 4
    %v869 = vadd.f32 %v867, %v868
    %v870 = vrot.slane %v869, 2
    %v871 = vadd.f32 %v869, %v870
    %v872 = vrot.slane %v871, 1
    %v873 = vadd.f32 %v871, %v872
    %vm876 = vcmask 1041409
    %v877 = vsel %vm876, %v873, %v804
    %v879 = vadd.f32 %v734, %v877
    %vm880 = vcmask 254976
    %881 = vst.msk [vmem:[#allocation2] sm:$0x3] %vm880, %v879
    %v882 = vld [vmem:[%s1] sm:$0xf]
    %v883 = vld [vmem:[%s1 + $0x4] sm:$0xf]
    %v884 = vld [vmem:[%s1 + $0x8] sm:$0xf]
    %v885 = vld [vmem:[%s1 + $0xc] sm:$0xf]
    %v886 = vld [vmem:[%s1 + $0x10] sm:$0xf]
    %v887 = vld [vmem:[%s1 + $0x14] sm:$0xf]
    %v888 = vld [vmem:[%s1 + $0x18] sm:$0xf]
    %v889 = vld [vmem:[%s1 + $0x1c] sm:$0xf]
    %v890 = vld [vmem:[%s1 + $0x20] sm:$0xf]
    %v891 = vld [vmem:[%s1 + $0x24] sm:$0xf]
    %v892 = vld [vmem:[%s1 + $0x28] sm:$0xf]
    %v893 = vld [vmem:[%s1 + $0x2c] sm:$0xf]
    %v894 = vld [vmem:[%s1 + $0x30] sm:$0xf]
    %v895 = vld [vmem:[%s1 + $0x34] sm:$0xf]
    %v896 = vld [vmem:[%s1 + $0x38] sm:$0xf]
    %v897 = vld [vmem:[%s1 + $0x3c] sm:$0xf]
    %v898 = vld [vmem:[%s4] sm:$0xf]
    %v899 = vld [vmem:[%s7] sm:$0x1]
    %v901 = vlaneseq
    %v902 = vshrl.u32 %v901, 7
    %v903 = vsub.s32 0, %v902
    %v904 = vrot.slane %v899, %v903
    %v922 = vunpack.c.l.b16 %v882
    %v923 = vunpack.c.l.b16 %v883
    %v924 = vunpack.c.l.b16 %v884
    %v925 = vunpack.c.l.b16 %v885
    %v926 = vunpack.c.l.b16 %v886
    %v927 = vunpack.c.l.b16 %v887
    %v928 = vunpack.c.l.b16 %v888
    %v929 = vunpack.c.l.b16 %v889
    %v930 = vunpack.c.l.b16 %v890
    %v931 = vunpack.c.l.b16 %v891
    %v932 = vunpack.c.l.b16 %v892
    %v933 = vunpack.c.l.b16 %v893
    %v934 = vunpack.c.l.b16 %v894
    %v935 = vunpack.c.l.b16 %v895
    %v936 = vunpack.c.l.b16 %v896
    %v937 = vunpack.c.l.b16 %v897
    %v938 = vpack.c.b16 %v923, %v922
    %v939 = vpack.c.b16 %v925, %v924
    %v940 = vpack.c.b16 %v927, %v926
    %v941 = vpack.c.b16 %v929, %v928
    %v942 = vpack.c.b16 %v931, %v930
    %v943 = vpack.c.b16 %v933, %v932
    %v944 = vpack.c.b16 %v935, %v934
    %v945 = vpack.c.b16 %v937, %v936
    %vm946 = vcmask 64512
    %v948 = vsel %vm946, %v938, 0
    %v951 = vsel %vm946, %v939, 0
    %v954 = vsel %vm946, %v940, 0
    %v957 = vsel %vm946, %v941, 0
    %v960 = vsel %vm946, %v942, 0
    %v963 = vsel %vm946, %v943, 0
    %v966 = vsel %vm946, %v944, 0
    %v969 = vsel %vm946, %v945, 0
    %vm971 = vcmask 1043456
    %v973 = vsel %vm971, %v898, 0
    %975 = vmatprep.subr.bf16.mxu0 0
    %976 = vmatpush1.bf16.msra.mxu0 %v973
    %977 = vmatprep.subr.bf16.mxu0 0
    %978 = vmatpush1.bf16.msra.mxu0 0
    %979 = vmatprep.subr.bf16.mxu0 0
    %980 = vmatpush1.bf16.msra.mxu0 0
    %981 = vmatprep.subr.bf16.mxu0 0
    %982 = vmatpush1.bf16.msra.mxu0 0
    %983 = vmatprep.subr.bf16.mxu0 0
    %984 = vmatpush1.bf16.msra.mxu0 0
    %985 = vmatprep.subr.bf16.mxu0 0
    %986 = vmatpush1.bf16.msra.mxu0 0
    %987 = vmatprep.subr.bf16.mxu0 0
    %988 = vmatpush1.bf16.msra.mxu0 0
    %989 = vmatprep.subr.bf16.mxu0 0
    %990 = vmatpush1.bf16.msra.mxu0 0
    %991 = vmatprep.subr.bf16.mxu0 0
    %992 = vmatpush1.bf16.msra.mxu0 0
    %993 = vmatprep.subr.bf16.mxu0 0
    %994 = vmatpush1.bf16.msra.mxu0 0
    %995 = vmatprep.subr.bf16.mxu0 0
    %996 = vmatpush1.bf16.msra.mxu0 0
    %997 = vmatprep.subr.bf16.mxu0 0
    %998 = vmatpush1.bf16.msra.mxu0 0
    %999 = vmatprep.subr.bf16.mxu0 0
    %1000 = vmatpush1.bf16.msra.mxu0 0
    %1001 = vmatprep.subr.bf16.mxu0 0
    %1002 = vmatpush1.bf16.msra.mxu0 0
    %1003 = vmatprep.subr.bf16.mxu0 0
    %1004 = vmatpush1.bf16.msra.mxu0 0
    %1005 = vmatprep.subr.bf16.mxu0 0
    %1006 = vmatpush1.bf16.msra.mxu0 0
    %1007 = vmatprep.mubr.bf16.mxu0 0
    %1008 = vmatmul.mubr.bf16.gmra.mrb[0].mxu0 %v948
    %v1009 = vpop.f32.mrb[0].mxu0
    %v1010 = vadd.f32 %v904, %v1009
    %v1011 = vpop.f32.mrb[0].mxu0
    %v1012 = vpop.f32.mrb[0].mxu0
    %v1013 = vadd.f32 %v904, %v1012
    %v1014 = vpop.f32.mrb[0].mxu0
    %1015 = vmatprep.mubr.bf16.mxu0 0
    %1016 = vmatmul.mubr.bf16.gmra.mrb[0].mxu0 %v951
    %v1017 = vpop.f32.mrb[0].mxu0
    %v1018 = vadd.f32 %v904, %v1017
    %v1019 = vpop.f32.mrb[0].mxu0
    %v1020 = vpop.f32.mrb[0].mxu0
    %v1021 = vadd.f32 %v904, %v1020
    %v1022 = vpop.f32.mrb[0].mxu0
    %1023 = vmatprep.mubr.bf16.mxu0 0
    %1024 = vmatmul.mubr.bf16.gmra.mrb[0].mxu0 %v954
    %v1025 = vpop.f32.mrb[0].mxu0
    %v1026 = vadd.f32 %v904, %v1025
    %v1027 = vpop.f32.mrb[0].mxu0
    %v1028 = vpop.f32.mrb[0].mxu0
    %v1029 = vadd.f32 %v904, %v1028
    %v1030 = vpop.f32.mrb[0].mxu0
    %1031 = vmatprep.mubr.bf16.mxu0 0
    %1032 = vmatmul.mubr.bf16.gmra.mrb[0].mxu0 %v957
    %v1033 = vpop.f32.mrb[0].mxu0
    %v1034 = vadd.f32 %v904, %v1033
    %v1035 = vpop.f32.mrb[0].mxu0
    %v1036 = vpop.f32.mrb[0].mxu0
    %v1037 = vadd.f32 %v904, %v1036
    %v1038 = vpop.f32.mrb[0].mxu0
    %1039 = vmatprep.mubr.bf16.mxu0 0
    %1040 = vmatmul.mubr.bf16.gmra.mrb[0].mxu0 %v960
    %v1041 = vpop.f32.mrb[0].mxu0
    %v1042 = vadd.f32 %v904, %v1041
    %v1043 = vpop.f32.mrb[0].mxu0
    %v1044 = vpop.f32.mrb[0].mxu0
    %v1045 = vadd.f32 %v904, %v1044
    %v1046 = vpop.f32.mrb[0].mxu0
    %1047 = vmatprep.mubr.bf16.mxu0 0
    %1048 = vmatmul.mubr.bf16.gmra.mrb[0].mxu0 %v963
    %v1049 = vpop.f32.mrb[0].mxu0
    %v1050 = vadd.f32 %v904, %v1049
    %v1051 = vpop.f32.mrb[0].mxu0
    %v1052 = vpop.f32.mrb[0].mxu0
    %v1053 = vadd.f32 %v904, %v1052
    %v1054 = vpop.f32.mrb[0].mxu0
    %1055 = vmatprep.mubr.bf16.mxu0 0
    %1056 = vmatmul.mubr.bf16.gmra.mrb[0].mxu0 %v966
    %v1057 = vpop.f32.mrb[0].mxu0
    %v1058 = vadd.f32 %v904, %v1057
    %v1059 = vpop.f32.mrb[0].mxu0
    %v1060 = vpop.f32.mrb[0].mxu0
    %v1061 = vadd.f32 %v904, %v1060
    %v1062 = vpop.f32.mrb[0].mxu0
    %1063 = vmatprep.mubr.bf16.mxu0 0
    %1064 = vmatmul.mubr.bf16.gmra.mrb[0].mxu0 %v969
    %v1065 = vpop.f32.mrb[0].mxu0
    %v1066 = vadd.f32 %v904, %v1065
    %v1067 = vpop.f32.mrb[0].mxu0
    %v1068 = vpop.f32.mrb[0].mxu0
    %v1069 = vadd.f32 %v904, %v1068
    %v1070 = vpop.f32.mrb[0].mxu0
    %1071 = vdwg.mxu0
    %v1072 = vmax.f32 %v1010, 0.0
    %v1073 = vmax.f32 %v1013, 0.0
    %v1074 = vmax.f32 %v1018, 0.0
    %v1075 = vmax.f32 %v1021, 0.0
    %v1076 = vmax.f32 %v1026, 0.0
    %v1077 = vmax.f32 %v1029, 0.0
    %v1078 = vmax.f32 %v1034, 0.0
    %v1079 = vmax.f32 %v1037, 0.0
    %v1080 = vmax.f32 %v1042, 0.0
    %v1081 = vmax.f32 %v1045, 0.0
    %v1082 = vmax.f32 %v1050, 0.0
    %v1083 = vmax.f32 %v1053, 0.0
    %v1084 = vmax.f32 %v1058, 0.0
    %v1085 = vmax.f32 %v1061, 0.0
    %v1086 = vmax.f32 %v1066, 0.0
    %v1087 = vmax.f32 %v1069, 0.0
    %s1088 = scalar_lea.vmem [#allocation2], 2
    %v1089 = vld [vmem:[%s1088] sm:$0x3]
    %v1090 = vsel %vm735, %v1072, 0.0
    %v1091 = vsel %vm735, %v1073, 0.0
    %v1092 = vadd.f32 %v1090, %v1091
    %v1093 = vsel %vm735, %v1074, 0.0
    %v1094 = vadd.f32 %v1092, %v1093
    %v1095 = vsel %vm735, %v1075, 0.0
    %v1096 = vadd.f32 %v1094, %v1095
    %v1097 = vsel %vm735, %v1076, 0.0
    %v1098 = vadd.f32 %v1096, %v1097
    %v1099 = vsel %vm735, %v1077, 0.0
    %v1100 = vadd.f32 %v1098, %v1099
    %v1101 = vsel %vm735, %v1078, 0.0
    %v1102 = vadd.f32 %v1100, %v1101
    %v1103 = vsel %vm735, %v1079, 0.0
    %v1104 = vadd.f32 %v1102, %v1103
    %v1105 = vrot.slane %v1104, 4
    %v1106 = vadd.f32 %v1104, %v1105
    %v1107 = vrot.slane %v1106, 2
    %v1108 = vadd.f32 %v1106, %v1107
    %v1109 = vrot.slane %v1108, 1
    %v1110 = vadd.f32 %v1108, %v1109
    %v1111 = vsel %vm735, %v1080, 0.0
    %v1112 = vsel %vm735, %v1081, 0.0
    %v1113 = vadd.f32 %v1111, %v1112
    %v1114 = vsel %vm735, %v1082, 0.0
    %v1115 = vadd.f32 %v1113, %v1114
    %v1116 = vsel %vm735, %v1083, 0.0
    %v1117 = vadd.f32 %v1115, %v1116
    %v1118 = vsel %vm735, %v1084, 0.0
    %v1119 = vadd.f32 %v1117, %v1118
    %v1120 = vsel %vm735, %v1085, 0.0
    %v1121 = vadd.f32 %v1119, %v1120
    %v1122 = vsel %vm735, %v1086, 0.0
    %v1123 = vadd.f32 %v1121, %v1122
    %v1124 = vsel %vm735, %v1087, 0.0
    %v1125 = vadd.f32 %v1123, %v1124
    %v1126 = vrot.slane %v1125, 4
    %v1127 = vadd.f32 %v1125, %v1126
    %v1128 = vrot.slane %v1127, 2
    %v1129 = vadd.f32 %v1127, %v1128
    %v1130 = vrot.slane %v1129, 1
    %v1131 = vadd.f32 %v1129, %v1130
    %v1134 = vsel %vm876, %v1131, %v1110
    %v1136 = vadd.f32 %v1089, %v1134
    %1137 = vst.msk [vmem:[%s1088] sm:$0x3] %vm880, %v1136
    %v1138 = vld [vmem:[%s2] sm:$0xf]
    %v1139 = vld [vmem:[%s2 + $0x4] sm:$0xf]
    %v1140 = vld [vmem:[%s2 + $0x8] sm:$0xf]
    %v1141 = vld [vmem:[%s2 + $0xc] sm:$0xf]
    %v1142 = vld [vmem:[%s5] sm:$0xf]
    %v1143 = vld [vmem:[%s5 + $0x4] sm:$0xf]
    %v1144 = vld [vmem:[%s5 + $0x8] sm:$0xf]
    %v1145 = vld [vmem:[%s5 + $0xc] sm:$0xf]
    %v1146 = vld [vmem:[%s5 + $0x10] sm:$0xf]
    %v1147 = vld [vmem:[%s5 + $0x14] sm:$0xf]
    %v1148 = vld [vmem:[%s5 + $0x18] sm:$0xf]
    %v1149 = vld [vmem:[%s5 + $0x1c] sm:$0xf]
    %v1150 = vld [vmem:[%s5 + $0x20] sm:$0xf]
    %v1151 = vld [vmem:[%s5 + $0x24] sm:$0xf]
    %v1152 = vld [vmem:[%s5 + $0x28] sm:$0xf]
    %v1153 = vld [vmem:[%s5 + $0x2c] sm:$0xf]
    %v1154 = vld [vmem:[%s5 + $0x30] sm:$0xf]
    %v1155 = vld [vmem:[%s5 + $0x34] sm:$0xf]
    %v1156 = vld [vmem:[%s5 + $0x38] sm:$0xf]
    %v1157 = vld [vmem:[%s5 + $0x3c] sm:$0xf]
    %v1158 = vld [vmem:[%s8] sm:$0x1]
    %v1160 = vlaneseq
    %v1161 = vshrl.u32 %v1160, 7
    %v1162 = vsub.s32 0, %v1161
    %v1163 = vrot.slane %v1158, %v1162
    %v1169 = vunpack.c.l.b16 %v1138
    %v1170 = vunpack.c.l.b16 %v1139
    %v1171 = vunpack.c.l.b16 %v1140
    %v1172 = vunpack.c.l.b16 %v1141
    %v1173 = vpack.c.b16 %v1170, %v1169
    %v1174 = vpack.c.b16 %v1172, %v1171
    %v1193 = vunpack.c.l.b16 %v1142
    %v1194 = vunpack.c.l.b16 %v1143
    %v1195 = vunpack.c.l.b16 %v1144
    %v1196 = vunpack.c.l.b16 %v1145
    %v1197 = vunpack.c.l.b16 %v1146
    %v1198 = vunpack.c.l.b16 %v1147
    %v1199 = vunpack.c.l.b16 %v1148
    %v1200 = vunpack.c.l.b16 %v1149
    %v1201 = vunpack.c.l.b16 %v1150
    %v1202 = vunpack.c.l.b16 %v1151
    %v1203 = vunpack.c.l.b16 %v1152
    %v1204 = vunpack.c.l.b16 %v1153
    %v1205 = vunpack.c.l.b16 %v1154
    %v1206 = vunpack.c.l.b16 %v1155
    %v1207 = vunpack.c.l.b16 %v1156
    %v1208 = vunpack.c.l.b16 %v1157
    %v1209 = vpack.c.b16 %v1194, %v1193
    %v1210 = vpack.c.b16 %v1196, %v1195
    %v1211 = vpack.c.b16 %v1198, %v1197
    %v1212 = vpack.c.b16 %v1200, %v1199
    %v1213 = vpack.c.b16 %v1202, %v1201
    %v1214 = vpack.c.b16 %v1204, %v1203
    %v1215 = vpack.c.b16 %v1206, %v1205
    %v1216 = vpack.c.b16 %v1208, %v1207
    %1225 = vmatprep.subr.bf16.mxu0 0
    %1226 = vmatpush1.bf16.msra.mxu0 %v1209
    %1227 = vmatprep.subr.bf16.mxu0 0
    %1228 = vmatpush1.bf16.msra.mxu0 %v1210
    %1229 = vmatprep.subr.bf16.mxu0 0
    %1230 = vmatpush1.bf16.msra.mxu0 %v1211
    %1231 = vmatprep.subr.bf16.mxu0 0
    %1232 = vmatpush1.bf16.msra.mxu0 %v1212
    %1233 = vmatprep.subr.bf16.mxu0 0
    %1234 = vmatpush1.bf16.msra.mxu0 %v1213
    %1235 = vmatprep.subr.bf16.mxu0 0
    %1236 = vmatpush1.bf16.msra.mxu0 %v1214
    %1237 = vmatprep.subr.bf16.mxu0 0
    %1238 = vmatpush1.bf16.msra.mxu0 %v1215
    %1239 = vmatprep.subr.bf16.mxu0 0
    %1240 = vmatpush1.bf16.msra.mxu0 %v1216
    %1241 = vmatprep.subr.bf16.mxu0 0
    %1242 = vmatpush1.bf16.msra.mxu0 0
    %1243 = vmatprep.subr.bf16.mxu0 0
    %1244 = vmatpush1.bf16.msra.mxu0 0
    %1245 = vmatprep.subr.bf16.mxu0 0
    %1246 = vmatpush1.bf16.msra.mxu0 0
    %1247 = vmatprep.subr.bf16.mxu0 0
    %1248 = vmatpush1.bf16.msra.mxu0 0
    %1249 = vmatprep.subr.bf16.mxu0 0
    %1250 = vmatpush1.bf16.msra.mxu0 0
    %1251 = vmatprep.subr.bf16.mxu0 0
    %1252 = vmatpush1.bf16.msra.mxu0 0
    %1253 = vmatprep.subr.bf16.mxu0 0
    %1254 = vmatpush1.bf16.msra.mxu0 0
    %1255 = vmatprep.subr.bf16.mxu0 0
    %1256 = vmatpush1.bf16.msra.mxu0 0
    %1257 = vmatprep.mubr.bf16.mxu0 0
    %1258 = vmatmul.mubr.bf16.gmra.mrb[0].mxu0 %v1173
    %v1259 = vpop.f32.mrb[0].mxu0
    %v1260 = vadd.f32 %v1163, %v1259
    %v1261 = vpop.f32.mrb[0].mxu0
    %v1262 = vpop.f32.mrb[0].mxu0
    %v1263 = vadd.f32 %v1163, %v1262
    %v1264 = vpop.f32.mrb[0].mxu0
    %1265 = vmatprep.mubr.bf16.mxu0 0
    %1266 = vmatmul.mubr.bf16.gmra.mrb[0].mxu0 %v1174
    %v1267 = vpop.f32.mrb[0].mxu0
    %v1268 = vadd.f32 %v1163, %v1267
    %v1269 = vpop.f32.mrb[0].mxu0
    %v1270 = vpop.f32.mrb[0].mxu0
    %v1271 = vadd.f32 %v1163, %v1270
    %v1272 = vpop.f32.mrb[0].mxu0
    %1273 = vdwg.mxu0
    %v1274 = vmax.f32 %v1260, 0.0
    %v1275 = vmax.f32 %v1263, 0.0
    %v1276 = vmax.f32 %v1268, 0.0
    %v1277 = vmax.f32 %v1271, 0.0
    %s1278 = scalar_lea.vmem [#allocation2], 4
    %v1279 = vld [vmem:[%s1278] sm:$0x3]
    %v1280 = vsel %vm735, %v1274, 0.0
    %v1281 = vsel %vm735, %v1275, 0.0
    %v1282 = vadd.f32 %v1280, %v1281
    %v1283 = vrot.slane %v1282, 4
    %v1284 = vadd.f32 %v1282, %v1283
    %v1285 = vrot.slane %v1284, 2
    %v1286 = vadd.f32 %v1284, %v1285
    %v1287 = vrot.slane %v1286, 1
    %v1288 = vadd.f32 %v1286, %v1287
    %v1289 = vsel %vm735, %v1276, 0.0
    %v1290 = vsel %vm735, %v1277, 0.0
    %v1291 = vadd.f32 %v1289, %v1290
    %v1292 = vrot.slane %v1291, 4
    %v1293 = vadd.f32 %v1291, %v1292
    %v1294 = vrot.slane %v1293, 2
    %v1295 = vadd.f32 %v1293, %v1294
    %v1296 = vrot.slane %v1295, 1
    %v1297 = vadd.f32 %v1295, %v1296
    %v1300 = vsel %vm876, %v1297, %v1288
    %v1302 = vadd.f32 %v1279, %v1300
    %1303 = vst.msk [vmem:[%s1278] sm:$0x3] %vm880, %v1302
    // Predicated region
    $region50: #{tpu_custom_call.1} parent=1 // pred_check
      %p1304 = pneg %p40
    $region51: #{tpu_custom_call.1} parent=1 // pred_check_branch
      %1306 = sbr.rel (%p1304) target = $region53
    $region52: #{tpu_custom_call.1} parent=1 // pred_region
      %v1307 = vld [vmem:[%s10] sm:$0x1]
      %v1309 = vlaneseq
      %v1310 = vshrl.u32 %v1309, 7
      %v1311 = vsub.s32 0, %v1310
      %v1312 = vrot.slane %v1307, %v1311
      %v1314 = vld [vmem:[#allocation2] sm:$0x3]
      %v1315 = vld [vmem:[%s9] sm:$0xff]
      %v1316 = vld [vmem:[%s9 + $0x8] sm:$0xff]
      %v1317 = vld [vmem:[%s9 + $0x10] sm:$0xff]
      %v1318 = vld [vmem:[%s9 + $0x18] sm:$0xff]
      %v1320 = vsel %vm735, %v1314, 0
      %1322 = vmatprep.subr.mxu0 0.0
      %1323 = vmatpush1.msra.mxu0 %v1315
      %1324 = vmatprep.subr.mxu0 0.0
      %1325 = vmatpush1.msra.mxu0 %v1316
      %1326 = vmatprep.subr.mxu0 0.0
      %1327 = vmatpush1.msra.mxu0 %v1317
      %1328 = vmatprep.subr.mxu0 0.0
      %1329 = vmatpush1.msra.mxu0 %v1318
      %1330 = vmatprep.subr.mxu0 0.0
      %1331 = vmatpush1.msra.mxu0 0.0
      %1332 = vmatprep.subr.mxu0 0.0
      %1333 = vmatpush1.msra.mxu0 0.0
      %1334 = vmatprep.subr.mxu0 0.0
      %1335 = vmatpush1.msra.mxu0 0.0
      %1336 = vmatprep.subr.mxu0 0.0
      %1337 = vmatpush1.msra.mxu0 0.0
      %1338 = vmatprep.subr.mxu0 0.0
      %1339 = vmatpush1.msra.mxu0 0.0
      %1340 = vmatprep.subr.mxu0 0.0
      %1341 = vmatpush1.msra.mxu0 0.0
      %1342 = vmatprep.subr.mxu0 0.0
      %1343 = vmatpush1.msra.mxu0 0.0
      %1344 = vmatprep.subr.mxu0 0.0
      %1345 = vmatpush1.msra.mxu0 0.0
      %1346 = vmatprep.subr.mxu0 0.0
      %1347 = vmatpush1.msra.mxu0 0.0
      %1348 = vmatprep.subr.mxu0 0.0
      %1349 = vmatpush1.msra.mxu0 0.0
      %1350 = vmatprep.subr.mxu0 0.0
      %1351 = vmatpush1.msra.mxu0 0.0
      %1352 = vmatprep.subr.mxu0 0.0
      %1353 = vmatpush1.msra.mxu0 0.0
      %1354 = vmatprep.subr.mxu0 0.0
      %1355 = vmatpush1.msra.mxu0 0.0
      %1356 = vmatprep.subr.mxu0 0.0
      %1357 = vmatpush1.msra.mxu0 0.0
      %1358 = vmatprep.subr.mxu0 0.0
      %1359 = vmatpush1.msra.mxu0 0.0
      %1360 = vmatprep.subr.mxu0 0.0
      %1361 = vmatpush1.msra.mxu0 0.0
      %1362 = vmatprep.subr.mxu0 0.0
      %1363 = vmatpush1.msra.mxu0 0.0
      %1364 = vmatprep.subr.mxu0 0.0
      %1365 = vmatpush1.msra.mxu0 0.0
      %1366 = vmatprep.subr.mxu0 0.0
      %1367 = vmatpush1.msra.mxu0 0.0
      %1368 = vmatprep.subr.mxu0 0.0
      %1369 = vmatpush1.msra.mxu0 0.0
      %1370 = vmatprep.subr.mxu0 0.0
      %1371 = vmatpush1.msra.mxu0 0.0
      %1372 = vmatprep.subr.mxu0 0.0
      %1373 = vmatpush1.msra.mxu0 0.0
      %1374 = vmatprep.subr.mxu0 0.0
      %1375 = vmatpush1.msra.mxu0 0.0
      %1376 = vmatprep.subr.mxu0 0.0
      %1377 = vmatpush1.msra.mxu0 0.0
      %1378 = vmatprep.subr.mxu0 0.0
      %1379 = vmatpush1.msra.mxu0 0.0
      %1380 = vmatprep.subr.mxu0 0.0
      %1381 = vmatpush1.msra.mxu0 0.0
      %1382 = vmatprep.subr.mxu0 0.0
      %1383 = vmatpush1.msra.mxu0 0.0
      %1384 = vmatprep.subr.mxu0 0.0
      %1385 = vmatpush1.msra.mxu0 0.0
      %1386 = vmatprep.mubr.f32.mxu0 0.0
      %1387 = vmatmul.mubr.f32.gmra.mrb[0].mxu0 %v1320
      %v1388 = vpop.f32.mrb[0].mxu0
      %v1389 = vadd.f32 0.0, %v1388
      %v1390 = vpop.f32.mrb[0].mxu0
      %1391 = vdwg.mxu0
      %v1392 = vadd.f32 %v1312, %v1389
      %v1393 = vld [vmem:[%s1088] sm:$0x3]
      %s1394 = scalar_lea.vmem %s9, 32
      %v1395 = vld [vmem:[%s1394] sm:$0xff]
      %v1396 = vld [vmem:[%s1394 + $0x8] sm:$0xff]
      %v1397 = vld [vmem:[%s1394 + $0x10] sm:$0xff]
      %v1398 = vld [vmem:[%s1394 + $0x18] sm:$0xff]
      %v1400 = vsel %vm735, %v1393, 0
      %1402 = vmatprep.subr.mxu0 0.0
      %1403 = vmatpush1.msra.mxu0 %v1395
      %1404 = vmatprep.subr.mxu0 0.0
      %1405 = vmatpush1.msra.mxu0 %v1396
      %1406 = vmatprep.subr.mxu0 0.0
      %1407 = vmatpush1.msra.mxu0 %v1397
      %1408 = vmatprep.subr.mxu0 0.0
      %1409 = vmatpush1.msra.mxu0 %v1398
      %1410 = vmatprep.subr.mxu0 0.0
      %1411 = vmatpush1.msra.mxu0 0.0
      %1412 = vmatprep.subr.mxu0 0.0
      %1413 = vmatpush1.msra.mxu0 0.0
      %1414 = vmatprep.subr.mxu0 0.0
      %1415 = vmatpush1.msra.mxu0 0.0
      %1416 = vmatprep.subr.mxu0 0.0
      %1417 = vmatpush1.msra.mxu0 0.0
      %1418 = vmatprep.subr.mxu0 0.0
      %1419 = vmatpush1.msra.mxu0 0.0
      %1420 = vmatprep.subr.mxu0 0.0
      %1421 = vmatpush1.msra.mxu0 0.0
      %1422 = vmatprep.subr.mxu0 0.0
      %1423 = vmatpush1.msra.mxu0 0.0
      %1424 = vmatprep.subr.mxu0 0.0
      %1425 = vmatpush1.msra.mxu0 0.0
      %1426 = vmatprep.subr.mxu0 0.0
      %1427 = vmatpush1.msra.mxu0 0.0
      %1428 = vmatprep.subr.mxu0 0.0
      %1429 = vmatpush1.msra.mxu0 0.0
      %1430 = vmatprep.subr.mxu0 0.0
      %1431 = vmatpush1.msra.mxu0 0.0
      %1432 = vmatprep.subr.mxu0 0.0
      %1433 = vmatpush1.msra.mxu0 0.0
      %1434 = vmatprep.subr.mxu0 0.0
      %1435 = vmatpush1.msra.mxu0 0.0
      %1436 = vmatprep.subr.mxu0 0.0
      %1437 = vmatpush1.msra.mxu0 0.0
      %1438 = vmatprep.subr.mxu0 0.0
      %1439 = vmatpush1.msra.mxu0 0.0
      %1440 = vmatprep.subr.mxu0 0.0
      %1441 = vmatpush1.msra.mxu0 0.0
      %1442 = vmatprep.subr.mxu0 0.0
      %1443 = vmatpush1.msra.mxu0 0.0
      %1444 = vmatprep.subr.mxu0 0.0
      %1445 = vmatpush1.msra.mxu0 0.0
      %1446 = vmatprep.subr.mxu0 0.0
      %1447 = vmatpush1.msra.mxu0 0.0
      %1448 = vmatprep.subr.mxu0 0.0
      %1449 = vmatpush1.msra.mxu0 0.0
      %1450 = vmatprep.subr.mxu0 0.0
      %1451 = vmatpush1.msra.mxu0 0.0
      %1452 = vmatprep.subr.mxu0 0.0
      %1453 = vmatpush1.msra.mxu0 0.0
      %1454 = vmatprep.subr.mxu0 0.0
      %1455 = vmatpush1.msra.mxu0 0.0
      %1456 = vmatprep.subr.mxu0 0.0
      %1457 = vmatpush1.msra.mxu0 0.0
      %1458 = vmatprep.subr.mxu0 0.0
      %1459 = vmatpush1.msra.mxu0 0.0
      %1460 = vmatprep.subr.mxu0 0.0
      %1461 = vmatpush1.msra.mxu0 0.0
      %1462 = vmatprep.subr.mxu0 0.0
      %1463 = vmatpush1.msra.mxu0 0.0
      %1464 = vmatprep.subr.mxu0 0.0
      %1465 = vmatpush1.msra.mxu0 0.0
      %1466 = vmatprep.mubr.f32.mxu0 0.0
      %1467 = vmatmul.mubr.f32.gmra.mrb[0].mxu0 %v1400
      %v1468 = vpop.f32.mrb[0].mxu0
      %v1469 = vadd.f32 0.0, %v1468
      %v1470 = vpop.f32.mrb[0].mxu0
      %1471 = vdwg.mxu0
      %v1472 = vadd.f32 %v1392, %v1469
      %v1473 = vld [vmem:[%s1278] sm:$0x3]
      %s1474 = scalar_lea.vmem %s9, 64
      %v1475 = vld [vmem:[%s1474] sm:$0xff]
      %v1476 = vld [vmem:[%s1474 + $0x8] sm:$0xff]
      %v1477 = vld [vmem:[%s1474 + $0x10] sm:$0xff]
      %v1478 = vld [vmem:[%s1474 + $0x18] sm:$0xff]
      %v1480 = vsel %vm735, %v1473, 0
      %1482 = vmatprep.subr.mxu0 0.0
      %1483 = vmatpush1.msra.mxu0 %v1475
      %1484 = vmatprep.subr.mxu0 0.0
      %1485 = vmatpush1.msra.mxu0 %v1476
      %1486 = vmatprep.subr.mxu0 0.0
      %1487 = vmatpush1.msra.mxu0 %v1477
      %1488 = vmatprep.subr.mxu0 0.0
      %1489 = vmatpush1.msra.mxu0 %v1478
      %1490 = vmatprep.subr.mxu0 0.0
      %1491 = vmatpush1.msra.mxu0 0.0
      %1492 = vmatprep.subr.mxu0 0.0
      %1493 = vmatpush1.msra.mxu0 0.0
      %1494 = vmatprep.subr.mxu0 0.0
      %1495 = vmatpush1.msra.mxu0 0.0
      %1496 = vmatprep.subr.mxu0 0.0
      %1497 = vmatpush1.msra.mxu0 0.0
      %1498 = vmatprep.subr.mxu0 0.0
      %1499 = vmatpush1.msra.mxu0 0.0
      %1500 = vmatprep.subr.mxu0 0.0
      %1501 = vmatpush1.msra.mxu0 0.0
      %1502 = vmatprep.subr.mxu0 0.0
      %1503 = vmatpush1.msra.mxu0 0.0
      %1504 = vmatprep.subr.mxu0 0.0
      %1505 = vmatpush1.msra.mxu0 0.0
      %1506 = vmatprep.subr.mxu0 0.0
      %1507 = vmatpush1.msra.mxu0 0.0
      %1508 = vmatprep.subr.mxu0 0.0
      %1509 = vmatpush1.msra.mxu0 0.0
      %1510 = vmatprep.subr.mxu0 0.0
      %1511 = vmatpush1.msra.mxu0 0.0
      %1512 = vmatprep.subr.mxu0 0.0
      %1513 = vmatpush1.msra.mxu0 0.0
      %1514 = vmatprep.subr.mxu0 0.0
      %1515 = vmatpush1.msra.mxu0 0.0
      %1516 = vmatprep.subr.mxu0 0.0
      %1517 = vmatpush1.msra.mxu0 0.0
      %1518 = vmatprep.subr.mxu0 0.0
      %1519 = vmatpush1.msra.mxu0 0.0
      %1520 = vmatprep.subr.mxu0 0.0
      %1521 = vmatpush1.msra.mxu0 0.0
      %1522 = vmatprep.subr.mxu0 0.0
      %1523 = vmatpush1.msra.mxu0 0.0
      %1524 = vmatprep.subr.mxu0 0.0
      %1525 = vmatpush1.msra.mxu0 0.0
      %1526 = vmatprep.subr.mxu0 0.0
      %1527 = vmatpush1.msra.mxu0 0.0
      %1528 = vmatprep.subr.mxu0 0.0
      %1529 = vmatpush1.msra.mxu0 0.0
      %1530 = vmatprep.subr.mxu0 0.0
      %1531 = vmatpush1.msra.mxu0 0.0
      %1532 = vmatprep.subr.mxu0 0.0
      %1533 = vmatpush1.msra.mxu0 0.0
      %1534 = vmatprep.subr.mxu0 0.0
      %1535 = vmatpush1.msra.mxu0 0.0
      %1536 = vmatprep.subr.mxu0 0.0
      %1537 = vmatpush1.msra.mxu0 0.0
      %1538 = vmatprep.subr.mxu0 0.0
      %1539 = vmatpush1.msra.mxu0 0.0
      %1540 = vmatprep.subr.mxu0 0.0
      %1541 = vmatpush1.msra.mxu0 0.0
      %1542 = vmatprep.subr.mxu0 0.0
      %1543 = vmatpush1.msra.mxu0 0.0
      %1544 = vmatprep.subr.mxu0 0.0
      %1545 = vmatpush1.msra.mxu0 0.0
      %1546 = vmatprep.mubr.f32.mxu0 0.0
      %1547 = vmatmul.mubr.f32.gmra.mrb[0].mxu0 %v1480
      %v1548 = vpop.f32.mrb[0].mxu0
      %v1549 = vadd.f32 0.0, %v1548
      %v1550 = vpop.f32.mrb[0].mxu0
      %1551 = vdwg.mxu0
      %v1552 = vadd.f32 %v1472, %v1549
      %1553 = vst [vmem:[#allocation3] sm:$0x3] %v1552
    $region53: #{tpu_custom_call.1} parent=1 // pred_fallthru
      _
    // Predicated region
    $region54: #{tpu_custom_call.1} parent=1 // pred_check
      _
    $region55: #{tpu_custom_call.1} parent=1 // pred_check_branch
      %1555 = sbr.rel (0) target = $region57
    $region56: #{tpu_custom_call.1} parent=1 // pred_region
      %s1557 = ssub.s32 32, 32
      %1558 = vsyncadd [#allocation4], %s1557
      %s1560 = sshll.u32 [#allocation3], 4
      %s1561 = int_to_ptr.vmem [resolvable:$true] %s1560
      %1563 = dma.vmem_to_hbm [thread:$0]  %s1561, 32, %s11, [#allocation4]
    $region57: #{tpu_custom_call.1} parent=1 // pred_fallthru
      _
    // Predicated region
    $region58: #{tpu_custom_call.1} parent=1 // pred_check
      _
    $region59: #{tpu_custom_call.1} parent=1 // pred_check_branch
      %1565 = sbr.rel (0) target = $region61
    $region60: #{tpu_custom_call.1} parent=1 // pred_region
      %1566 = dma.done [#allocation4], 32
    $region61: #{tpu_custom_call.1} parent=1 // pred_fallthru
      _
    %1567 = vsyncpa [#allocation4], 1

</llo_original>
